<compile_context>
chip_gen: v7x
topology: tpu7x:2x2x1
jax: 0.10.0
libtpu: 0.0.40
codegen_flags: <defaults>
</compile_context>

<pallas_src>
import functools

import numpy as np
import jax
import jax.numpy as jnp
from jax.experimental import pallas as pl
from jax.experimental.pallas import tpu as pltpu


def gat_fused_kernel(h_ref, w_ref, abd_ref, adj_ref, o_ref, *,
                     num_heads, out_dim, tile_m):
    """All heads per invocation; grid axis 0 = dst-row tiles.

    h_ref   : (N, in_dim)          full node features (f32)
    w_ref   : (in_dim, H*D)        all head projections, concatenated
    abd_ref : (H*D, 2*H)           block-diag attention vectors:
                                   cols [0:H]  -> a_src per head
                                   cols [H:2H] -> a_dst per head
    adj_ref : (tile_m, N) int8     adjacency adj[dst, src] for this dst tile
    o_ref   : (tile_m, H*D)        'cat'-layout output slab for this dst tile
    """
    i = pl.program_id(0)
    row0 = pl.multiple_of(i * tile_m, tile_m)

    h_all = h_ref[...]                                   # (N, in_dim)
    w_all = w_ref[...]                                   # (in_dim, H*D)
    a_bd = abd_ref[...]                                  # (H*D, 2H)

    # One wide MXU matmul for all heads: z_all[:, hd*D:(hd+1)*D] = h @ W[hd].
    z_all = jnp.dot(h_all, w_all, preferred_element_type=jnp.float32)    # (N, H*D)

    # Per-node attention-score contributions for all heads, one MXU matmul:
    #   st_all[:, hd]     = a_src[hd] . z_hd   (node as src)
    #   st_all[:, H + hd] = a_dst[hd] . z_hd   (node as dst)
    st_all = jnp.dot(z_all, a_bd, preferred_element_type=jnp.float32)    # (N, 2H)
    st_T = jnp.transpose(st_all)                         # (2H, N): one XLU transpose
                                                         # serves every head's src row.

    # dst-tile scores: recompute from the (tiny) dst row slice of h (cheap,
    # avoids dynamic value slicing along sublanes).
    h_tile = h_ref[pl.ds(row0, tile_m), :]                               # (tile_m, in_dim)
    z_tile = jnp.dot(h_tile, w_all, preferred_element_type=jnp.float32)  # (tile_m, H*D)
    st_tile = jnp.dot(z_tile, a_bd, preferred_element_type=jnp.float32)  # (tile_m, 2H)

    mask = adj_ref[...] != 0                              # (tile_m, N) bool

    outs = []
    for hd in range(num_heads):                           # static, fully unrolled
        s_row = st_T[hd:hd + 1, :]                        # (1, N)      src contribution
        t_col = st_tile[:, num_heads + hd:num_heads + hd + 1]   # (tile_m, 1) dst contribution
        e = t_col + s_row                                 # (tile_m, N)
        e = jnp.where(e >= 0, e, 0.01 * e)                # LeakyReLU(0.01)
        e = jnp.where(mask, e, -1e30)                     # mask non-edges

        # masked softmax over incoming edges (src axis); exact divide on a
        # (tile_m, 1) vector -- negligible VALU cost, keeps full f32 accuracy.
        m = jnp.max(e, axis=-1, keepdims=True)
        p = jnp.exp(e - m)
        denom = jnp.sum(p, axis=-1, keepdims=True)
        alpha = p / denom

        z_hd = z_all[:, hd * out_dim:(hd + 1) * out_dim]  # (N, D)
        outs.append(jnp.dot(alpha, z_hd, preferred_element_type=jnp.float32))

    # Single lane-dense store of the 'cat' layout (head index major in features).
    o_ref[...] = jnp.concatenate(outs, axis=-1).astype(o_ref.dtype)


def multi_head_gat(h, W, A, adj, merge="cat", tile_m=None):
    """h: (N, in_dim); W: (H, in_dim, D); A: (H, 2, D); adj: (N, N) {0,1}."""
    num_heads, in_dim, out_dim = W.shape
    N = h.shape[0]
    hd_dim = num_heads * out_dim

    if tile_m is None:
        tile_m = min(N, 256)
    assert N % tile_m == 0, "TODO(synk): ragged dst tiling not handled"

    # Fold per-head weights into one wide projection + block-diag attention mat.
    w_all = jnp.transpose(W, (1, 0, 2)).reshape(in_dim, hd_dim)
    a_bd_np = np.zeros((hd_dim, 2 * num_heads), dtype=np.float32)
    A_np = np.asarray(A)
    for hd in range(num_heads):
        a_bd_np[hd * out_dim:(hd + 1) * out_dim, hd] = A_np[hd, 0]              # a_src
        a_bd_np[hd * out_dim:(hd + 1) * out_dim, num_heads + hd] = A_np[hd, 1]  # a_dst
    a_bd = jnp.asarray(a_bd_np)

    adj_i8 = adj.astype(jnp.int8)   # 4x less DMA / VMEM than f32

    kernel = functools.partial(gat_fused_kernel, num_heads=num_heads,
                               out_dim=out_dim, tile_m=tile_m)

    out = pl.pallas_call(
        kernel,
        out_shape=jax.ShapeDtypeStruct((N, hd_dim), jnp.float32),
        grid_spec=pltpu.PrefetchScalarGridSpec(
            num_scalar_prefetch=0,
            grid=(N // tile_m,),
            in_specs=[
                pl.BlockSpec((N, in_dim), lambda i: (0, 0)),
                pl.BlockSpec((in_dim, hd_dim), lambda i: (0, 0)),
                pl.BlockSpec((hd_dim, 2 * num_heads), lambda i: (0, 0)),
                pl.BlockSpec((tile_m, N), lambda i: (i, 0)),
            ],
            out_specs=pl.BlockSpec((tile_m, hd_dim), lambda i: (i, 0)),
        ),
        # dst tiles are fully independent -> shard across v7x's 2 TensorCores;
        # neutral (and safe) on v5e/v6e.
        compiler_params=pltpu.CompilerParams(
            dimension_semantics=("parallel",)),
    )(h, w_all, a_bd, adj_i8)

    if merge == "cat":
        return out                      # (N, H*D) == torch.cat(head_outs, dim=1)
    # Faithful to the provided module: torch.mean(torch.stack(head_outs)) has
    # no dim argument -> scalar mean over all elements.
    return jnp.mean(out)


def reference(h, W, A, adj):
    outs = []
    for hd in range(W.shape[0]):
        z = h @ W[hd]
        s = z @ A[hd, 0]
        t = z @ A[hd, 1]
        e = t[:, None] + s[None, :]
        e = jnp.where(e >= 0, e, 0.01 * e)
        e = jnp.where(adj > 0, e, -jnp.inf)
        alpha = jax.nn.softmax(e, axis=-1)
        outs.append(alpha @ z)
    return jnp.concatenate(outs, axis=1)


if __name__ == "__main__":
    N, in_dim, out_dim, num_heads = 64, 8, 8, 4
    tile_m = 32                                   # exercises a 2-step dst-tile grid

    key = jax.random.PRNGKey(0)
    k_h, k_w, k_a, k_e = jax.random.split(key, 4)

    # node features
    h = jax.random.normal(k_h, (N, in_dim), dtype=jnp.float32)

    # xavier_normal_ with gain = calculate_gain('relu') = sqrt(2)
    gain = float(np.sqrt(2.0))
    fc_std = gain * float(np.sqrt(2.0 / (in_dim + out_dim)))
    attn_std = gain * float(np.sqrt(2.0 / (2 * out_dim + 1)))

    # W[hd] = fc.weight.T  -> (in_dim, out_dim)
    W = fc_std * jax.random.normal(k_w, (num_heads, in_dim, out_dim),
                                   dtype=jnp.float32)
    # attn_fc.weight has shape (1, 2*out_dim); split into [a_src, a_dst]
    A = attn_std * jax.random.normal(k_a, (num_heads, 2, out_dim),
                                     dtype=jnp.float32)

    # graph: self-loops + directed ring + a few random edges; adj[dst, src]
    adj_np = np.zeros((N, N), dtype=np.int8)
    adj_np[np.arange(N), np.arange(N)] = 1                      # self loops
    adj_np[(np.arange(N) + 1) % N, np.arange(N)] = 1            # ring i -> i+1
    extra = np.array(jax.random.bernoulli(k_e, 0.1, (N, N)), dtype=np.int8)
    adj_np = np.maximum(adj_np, extra)
    adj = jnp.asarray(adj_np)

    out = multi_head_gat(h, W, A, adj, merge="cat", tile_m=tile_m)
    out = jax.block_until_ready(out)

    ref = reference(h, W, A, adj)
    assert out.shape == (N, num_heads * out_dim)
    np.testing.assert_allclose(np.asarray(out), np.asarray(ref),
                               rtol=2e-3, atol=2e-3)
    print("KERNEL_OK")
</pallas_src>

<mosaic_0001>
module attributes {stable_mosaic.version = 11 : i64} {
  func.func @gat_fused_kernel(%arg0: i32, %arg1: memref<64x8xf32, #tpu.memory_space<vmem>>, %arg2: memref<8x32xf32, #tpu.memory_space<vmem>>, %arg3: memref<32x8xf32, #tpu.memory_space<vmem>>, %arg4: memref<32x64xi8, #tpu.memory_space<vmem>>, %arg5: memref<32x32xf32, #tpu.memory_space<vmem>>) attributes {dimension_semantics = [#tpu.dimension_semantics<parallel>], iteration_bounds = array<i64: 2>, scalar_prefetch = 0 : i64, scratch_operands = 0 : i64, tpu.core_type = #tpu.core_type<tc>, window_params = [{pipeline_mode = #tpu.pipeline_mode<synchronous>, transform_indices = @transform_0, window_bounds = array<i64: 64, 8>}, {pipeline_mode = #tpu.pipeline_mode<synchronous>, transform_indices = @transform_1, window_bounds = array<i64: 8, 32>}, {pipeline_mode = #tpu.pipeline_mode<synchronous>, transform_indices = @transform_2, window_bounds = array<i64: 32, 8>}, {transform_indices = @transform_3, window_bounds = array<i64: 32, 64>}, {transform_indices = @transform_4, window_bounds = array<i64: 32, 32>}]} {
    %c32_i32 = arith.constant 32 : i32
    %0 = arith.muli %arg0, %c32_i32 : i32
    %1 = tpu.assume_multiple %0, 32 : i32
    %c0 = arith.constant 0 : index
    %c0_0 = arith.constant 0 : index
    %2 = vector.load %arg1[%c0, %c0_0] : memref<64x8xf32, #tpu.memory_space<vmem>>, vector<64x8xf32>
    %c0_1 = arith.constant 0 : index
    %c0_2 = arith.constant 0 : index
    %3 = vector.load %arg2[%c0_1, %c0_2] : memref<8x32xf32, #tpu.memory_space<vmem>>, vector<8x32xf32>
    %c0_3 = arith.constant 0 : index
    %c0_4 = arith.constant 0 : index
    %4 = vector.load %arg3[%c0_3, %c0_4] : memref<32x8xf32, #tpu.memory_space<vmem>>, vector<32x8xf32>
    %cst = arith.constant dense<0.000000e+00> : vector<64x32xf32>
    %5 = tpu.matmul %2, %3, %cst {dimension_numbers = #tpu.dot_dimension_numbers<[1], [0], [0], [1], [0, 0, 1, 1], [], []>} : vector<64x8xf32>, vector<8x32xf32>, vector<64x32xf32> -> vector<64x32xf32>
    %cst_5 = arith.constant dense<0.000000e+00> : vector<64x8xf32>
    %6 = tpu.matmul %5, %4, %cst_5 {dimension_numbers = #tpu.dot_dimension_numbers<[1], [0], [0], [1], [0, 0, 1, 1], [], []>} : vector<64x32xf32>, vector<32x8xf32>, vector<64x8xf32> -> vector<64x8xf32>
    %7 = tpu.transpose %6, [1, 0] : vector<64x8xf32> -> vector<8x64xf32>
    %8 = arith.index_cast %1 : i32 to index
    %c0_6 = arith.constant 0 : index
    %9 = vector.load %arg1[%8, %c0_6] : memref<64x8xf32, #tpu.memory_space<vmem>>, vector<32x8xf32>
    %cst_7 = arith.constant dense<0.000000e+00> : vector<32x32xf32>
    %10 = tpu.matmul %9, %3, %cst_7 {dimension_numbers = #tpu.dot_dimension_numbers<[1], [0], [0], [1], [0, 0, 1, 1], [], []>} : vector<32x8xf32>, vector<8x32xf32>, vector<32x32xf32> -> vector<32x32xf32>
    %cst_8 = arith.constant dense<0.000000e+00> : vector<32x8xf32>
    %11 = tpu.matmul %10, %4, %cst_8 {dimension_numbers = #tpu.dot_dimension_numbers<[1], [0], [0], [1], [0, 0, 1, 1], [], []>} : vector<32x32xf32>, vector<32x8xf32>, vector<32x8xf32> -> vector<32x8xf32>
    %c0_9 = arith.constant 0 : index
    %c0_10 = arith.constant 0 : index
    %12 = vector.load %arg4[%c0_9, %c0_10] : memref<32x64xi8, #tpu.memory_space<vmem>>, vector<32x64xi8>
    %c0_i8 = arith.constant 0 : i8
    %13 = vector.broadcast %c0_i8 : i8 to vector<32x64xi8>
    %14 = arith.cmpi ne, %12, %13 : vector<32x64xi8>
    %15 = vector.extract_strided_slice %7 {offsets = [0, 0], sizes = [1, 64], strides = [1, 1]} : vector<8x64xf32> to vector<1x64xf32>
    %16 = vector.extract_strided_slice %11 {offsets = [0, 4], sizes = [32, 1], strides = [1, 1]} : vector<32x8xf32> to vector<32x1xf32>
    %17 = vector.broadcast %16 : vector<32x1xf32> to vector<32x64xf32>
    %18 = vector.broadcast %15 : vector<1x64xf32> to vector<32x64xf32>
    %19 = arith.addf %17, %18 : vector<32x64xf32>
    %cst_11 = arith.constant 0.000000e+00 : f32
    %20 = vector.broadcast %cst_11 : f32 to vector<32x64xf32>
    %21 = arith.cmpf oge, %19, %20 : vector<32x64xf32>
    %cst_12 = arith.constant 0.00999999977 : f32
    %22 = vector.broadcast %cst_12 : f32 to vector<32x64xf32>
    %23 = arith.mulf %22, %19 : vector<32x64xf32>
    %24 = arith.select %21, %19, %23 : vector<32x64xi1>, vector<32x64xf32>
    %cst_13 = arith.constant -1.000000e+30 : f32
    %25 = vector.broadcast %cst_13 : f32 to vector<32x64xf32>
    %26 = arith.select %14, %24, %25 : vector<32x64xi1>, vector<32x64xf32>
    %cst_14 = arith.constant dense<0xFF800000> : vector<32xf32>
    %27 = vector.multi_reduction <maximumf>, %26, %cst_14 [1] : vector<32x64xf32> to vector<32xf32>
    %28 = vector.shape_cast %27 : vector<32xf32> to vector<32x1xf32>
    %29 = vector.broadcast %28 : vector<32x1xf32> to vector<32x64xf32>
    %30 = arith.subf %26, %29 : vector<32x64xf32>
    %31 = math.exp %30 : vector<32x64xf32>
    %cst_15 = arith.constant dense<0.000000e+00> : vector<32xf32>
    %32 = vector.multi_reduction <add>, %31, %cst_15 [1] : vector<32x64xf32> to vector<32xf32>
    %33 = vector.shape_cast %32 : vector<32xf32> to vector<32x1xf32>
    %34 = vector.broadcast %33 : vector<32x1xf32> to vector<32x64xf32>
    %35 = arith.divf %31, %34 : vector<32x64xf32>
    %36 = vector.extract_strided_slice %5 {offsets = [0, 0], sizes = [64, 8], strides = [1, 1]} : vector<64x32xf32> to vector<64x8xf32>
    %cst_16 = arith.constant dense<0.000000e+00> : vector<32x8xf32>
    %37 = tpu.matmul %35, %36, %cst_16 {dimension_numbers = #tpu.dot_dimension_numbers<[1], [0], [0], [1], [0, 0, 1, 1], [], []>} : vector<32x64xf32>, vector<64x8xf32>, vector<32x8xf32> -> vector<32x8xf32>
    %38 = vector.extract_strided_slice %7 {offsets = [1, 0], sizes = [1, 64], strides = [1, 1]} : vector<8x64xf32> to vector<1x64xf32>
    %39 = vector.extract_strided_slice %11 {offsets = [0, 5], sizes = [32, 1], strides = [1, 1]} : vector<32x8xf32> to vector<32x1xf32>
    %40 = vector.broadcast %39 : vector<32x1xf32> to vector<32x64xf32>
    %41 = vector.broadcast %38 : vector<1x64xf32> to vector<32x64xf32>
    %42 = arith.addf %40, %41 : vector<32x64xf32>
    %cst_17 = arith.constant 0.000000e+00 : f32
    %43 = vector.broadcast %cst_17 : f32 to vector<32x64xf32>
    %44 = arith.cmpf oge, %42, %43 : vector<32x64xf32>
    %cst_18 = arith.constant 0.00999999977 : f32
    %45 = vector.broadcast %cst_18 : f32 to vector<32x64xf32>
    %46 = arith.mulf %45, %42 : vector<32x64xf32>
    %47 = arith.select %44, %42, %46 : vector<32x64xi1>, vector<32x64xf32>
    %cst_19 = arith.constant -1.000000e+30 : f32
    %48 = vector.broadcast %cst_19 : f32 to vector<32x64xf32>
    %49 = arith.select %14, %47, %48 : vector<32x64xi1>, vector<32x64xf32>
    %cst_20 = arith.constant dense<0xFF800000> : vector<32xf32>
    %50 = vector.multi_reduction <maximumf>, %49, %cst_20 [1] : vector<32x64xf32> to vector<32xf32>
    %51 = vector.shape_cast %50 : vector<32xf32> to vector<32x1xf32>
    %52 = vector.broadcast %51 : vector<32x1xf32> to vector<32x64xf32>
    %53 = arith.subf %49, %52 : vector<32x64xf32>
    %54 = math.exp %53 : vector<32x64xf32>
    %cst_21 = arith.constant dense<0.000000e+00> : vector<32xf32>
    %55 = vector.multi_reduction <add>, %54, %cst_21 [1] : vector<32x64xf32> to vector<32xf32>
    %56 = vector.shape_cast %55 : vector<32xf32> to vector<32x1xf32>
    %57 = vector.broadcast %56 : vector<32x1xf32> to vector<32x64xf32>
    %58 = arith.divf %54, %57 : vector<32x64xf32>
    %59 = vector.extract_strided_slice %5 {offsets = [0, 8], sizes = [64, 8], strides = [1, 1]} : vector<64x32xf32> to vector<64x8xf32>
    %cst_22 = arith.constant dense<0.000000e+00> : vector<32x8xf32>
    %60 = tpu.matmul %58, %59, %cst_22 {dimension_numbers = #tpu.dot_dimension_numbers<[1], [0], [0], [1], [0, 0, 1, 1], [], []>} : vector<32x64xf32>, vector<64x8xf32>, vector<32x8xf32> -> vector<32x8xf32>
    %61 = vector.extract_strided_slice %7 {offsets = [2, 0], sizes = [1, 64], strides = [1, 1]} : vector<8x64xf32> to vector<1x64xf32>
    %62 = vector.extract_strided_slice %11 {offsets = [0, 6], sizes = [32, 1], strides = [1, 1]} : vector<32x8xf32> to vector<32x1xf32>
    %63 = vector.broadcast %62 : vector<32x1xf32> to vector<32x64xf32>
    %64 = vector.broadcast %61 : vector<1x64xf32> to vector<32x64xf32>
    %65 = arith.addf %63, %64 : vector<32x64xf32>
    %cst_23 = arith.constant 0.000000e+00 : f32
    %66 = vector.broadcast %cst_23 : f32 to vector<32x64xf32>
    %67 = arith.cmpf oge, %65, %66 : vector<32x64xf32>
    %cst_24 = arith.constant 0.00999999977 : f32
    %68 = vector.broadcast %cst_24 : f32 to vector<32x64xf32>
    %69 = arith.mulf %68, %65 : vector<32x64xf32>
    %70 = arith.select %67, %65, %69 : vector<32x64xi1>, vector<32x64xf32>
    %cst_25 = arith.constant -1.000000e+30 : f32
    %71 = vector.broadcast %cst_25 : f32 to vector<32x64xf32>
    %72 = arith.select %14, %70, %71 : vector<32x64xi1>, vector<32x64xf32>
    %cst_26 = arith.constant dense<0xFF800000> : vector<32xf32>
    %73 = vector.multi_reduction <maximumf>, %72, %cst_26 [1] : vector<32x64xf32> to vector<32xf32>
    %74 = vector.shape_cast %73 : vector<32xf32> to vector<32x1xf32>
    %75 = vector.broadcast %74 : vector<32x1xf32> to vector<32x64xf32>
    %76 = arith.subf %72, %75 : vector<32x64xf32>
    %77 = math.exp %76 : vector<32x64xf32>
    %cst_27 = arith.constant dense<0.000000e+00> : vector<32xf32>
    %78 = vector.multi_reduction <add>, %77, %cst_27 [1] : vector<32x64xf32> to vector<32xf32>
    %79 = vector.shape_cast %78 : vector<32xf32> to vector<32x1xf32>
    %80 = vector.broadcast %79 : vector<32x1xf32> to vector<32x64xf32>
    %81 = arith.divf %77, %80 : vector<32x64xf32>
    %82 = vector.extract_strided_slice %5 {offsets = [0, 16], sizes = [64, 8], strides = [1, 1]} : vector<64x32xf32> to vector<64x8xf32>
    %cst_28 = arith.constant dense<0.000000e+00> : vector<32x8xf32>
    %83 = tpu.matmul %81, %82, %cst_28 {dimension_numbers = #tpu.dot_dimension_numbers<[1], [0], [0], [1], [0, 0, 1, 1], [], []>} : vector<32x64xf32>, vector<64x8xf32>, vector<32x8xf32> -> vector<32x8xf32>
    %84 = vector.extract_strided_slice %7 {offsets = [3, 0], sizes = [1, 64], strides = [1, 1]} : vector<8x64xf32> to vector<1x64xf32>
    %85 = vector.extract_strided_slice %11 {offsets = [0, 7], sizes = [32, 1], strides = [1, 1]} : vector<32x8xf32> to vector<32x1xf32>
    %86 = vector.broadcast %85 : vector<32x1xf32> to vector<32x64xf32>
    %87 = vector.broadcast %84 : vector<1x64xf32> to vector<32x64xf32>
    %88 = arith.addf %86, %87 : vector<32x64xf32>
    %cst_29 = arith.constant 0.000000e+00 : f32
    %89 = vector.broadcast %cst_29 : f32 to vector<32x64xf32>
    %90 = arith.cmpf oge, %88, %89 : vector<32x64xf32>
    %cst_30 = arith.constant 0.00999999977 : f32
    %91 = vector.broadcast %cst_30 : f32 to vector<32x64xf32>
    %92 = arith.mulf %91, %88 : vector<32x64xf32>
    %93 = arith.select %90, %88, %92 : vector<32x64xi1>, vector<32x64xf32>
    %cst_31 = arith.constant -1.000000e+30 : f32
    %94 = vector.broadcast %cst_31 : f32 to vector<32x64xf32>
    %95 = arith.select %14, %93, %94 : vector<32x64xi1>, vector<32x64xf32>
    %cst_32 = arith.constant dense<0xFF800000> : vector<32xf32>
    %96 = vector.multi_reduction <maximumf>, %95, %cst_32 [1] : vector<32x64xf32> to vector<32xf32>
    %97 = vector.shape_cast %96 : vector<32xf32> to vector<32x1xf32>
    %98 = vector.broadcast %97 : vector<32x1xf32> to vector<32x64xf32>
    %99 = arith.subf %95, %98 : vector<32x64xf32>
    %100 = math.exp %99 : vector<32x64xf32>
    %cst_33 = arith.constant dense<0.000000e+00> : vector<32xf32>
    %101 = vector.multi_reduction <add>, %100, %cst_33 [1] : vector<32x64xf32> to vector<32xf32>
    %102 = vector.shape_cast %101 : vector<32xf32> to vector<32x1xf32>
    %103 = vector.broadcast %102 : vector<32x1xf32> to vector<32x64xf32>
    %104 = arith.divf %100, %103 : vector<32x64xf32>
    %105 = vector.extract_strided_slice %5 {offsets = [0, 24], sizes = [64, 8], strides = [1, 1]} : vector<64x32xf32> to vector<64x8xf32>
    %cst_34 = arith.constant dense<0.000000e+00> : vector<32x8xf32>
    %106 = tpu.matmul %104, %105, %cst_34 {dimension_numbers = #tpu.dot_dimension_numbers<[1], [0], [0], [1], [0, 0, 1, 1], [], []>} : vector<32x64xf32>, vector<64x8xf32>, vector<32x8xf32> -> vector<32x8xf32>
    %107 = tpu.concatenate %37, %60, %83, %106 in 1 : vector<32x8xf32>, vector<32x8xf32>, vector<32x8xf32>, vector<32x8xf32> -> vector<32x32xf32>
    %c0_35 = arith.constant 0 : index
    %c0_36 = arith.constant 0 : index
    %108 = vector.load %arg5[%c0_35, %c0_36] : memref<32x32xf32, #tpu.memory_space<vmem>>, vector<32x32xf32>
    tpu.vector_store %arg5[%c0_35, %c0_36], %107 {strides = array<i32>} : memref<32x32xf32, #tpu.memory_space<vmem>>, vector<32x32xf32>,
    return
  }
  func.func @transform_0(%arg0: i32) -> (i32, i32) {
    %c0_i32 = arith.constant 0 : i32
    %c0_i32_0 = arith.constant 0 : i32
    %c0_i32_1 = arith.constant 0 : i32
    return %c0_i32, %c0_i32_0 : i32, i32
  }
  func.func @transform_1(%arg0: i32) -> (i32, i32) {
    %c0_i32 = arith.constant 0 : i32
    %c0_i32_0 = arith.constant 0 : i32
    %c0_i32_1 = arith.constant 0 : i32
    return %c0_i32, %c0_i32_0 : i32, i32
  }
  func.func @transform_2(%arg0: i32) -> (i32, i32) {
    %c0_i32 = arith.constant 0 : i32
    %c0_i32_0 = arith.constant 0 : i32
    %c0_i32_1 = arith.constant 0 : i32
    return %c0_i32, %c0_i32_0 : i32, i32
  }
  func.func @transform_3(%arg0: i32) -> (i32, i32) {
    %c0_i32 = arith.constant 0 : i32
    %c0_i32_0 = arith.constant 0 : i32
    return %arg0, %c0_i32 : i32, i32
  }
  func.func @transform_4(%arg0: i32) -> (i32, i32) {
    %c0_i32 = arith.constant 0 : i32
    %c0_i32_0 = arith.constant 0 : i32
    return %arg0, %c0_i32 : i32, i32
  }
}

</mosaic_0001>

<llo_original>
// kernel: tpu_custom_call.1
$region0: #{tpu_custom_call.1}
  #allocation0 [shape = 'u32[]', space=smem, size = 0x4, offset = 0x4, fixed_abs, tag = 'smem constant byte address 0x4 - core index']
  #allocation1 [shape = 'u32[144,128]{1,0:T(1,128)}', space=vmem, size = 0x12000, scoped, tag = 'internal scratch']
  %s0 = inlined_call_operand.vmem [shape: f32[64,8], index: 0, kind: input, shape index: {}]
  %s1 = inlined_call_operand.vmem [shape: f32[8,32], index: 1, kind: input, shape index: {}]
  %s2 = inlined_call_operand.vmem [shape: f32[32,8], index: 2, kind: input, shape index: {}]
  %s3 = inlined_call_operand.vmem [shape: s8[64,64], index: 3, kind: input, shape index: {}]
  %s4 = inlined_call_operand.vmem [shape: f32[64,32], index: 4, kind: output, shape index: {}]
  %s5 = sld [smem:[#allocation0]]
  $region49: #{tpu_custom_call.1} parent=0
    _
  %s7 = ssub.s32 1, %s5
  %s8 = scalar_select 0, %s7, %s5
  loop: start=0, step=1, limit=4
  $region2: #{tpu_custom_call.1} parent=0 // loop_pre_header
    _
  $region3: #{tpu_custom_call.1} parent=0 // loop_header
    %s10 = sphi 0, %s14
    %p11 = scmp.ge.s32.totalorder %s10, 4
    %s18 = sphi 0, %s18
    %s20 = sphi 0, %s18
    %s21 = sphi 0, %s20
    %s35 = sphi 0, %s21
    %s39 = sphi 0, %s39
    %s41 = sphi 0, %s39
    %s42 = sphi 0, %s41
    %s56 = sphi 0, %s42
    %s60 = sphi 0, %s60
    %s62 = sphi 0, %s60
    %s63 = sphi 0, %s62
    %s77 = sphi 0, %s63
    %s83 = sphi 0, %s85
    %s86 = sphi 0, %s83
    %s87 = sphi 0, %s86
    %s103 = sphi 0, %s87
    %s109 = sphi 0, %s111
    %s112 = sphi 0, %s109
    %s113 = sphi 0, %s112
    %s129 = sphi 0, %s113
  $region4: #{tpu_custom_call.1} parent=0 // loop_header_branch
    %13 = sbr.rel (%p11) target = $region8
  $region5: #{tpu_custom_call.1} parent=0 // loop_body
    %s15 = ssub.s32 %s10, 1
    %s16 = ssub.s32 %s10, 2
    %s17 = sadd.s32 %s10, 1
    %s19 = sadd.s32 %s18, 1
    %p22 = scmp.eq.s32.totalorder %s10, 1
    %p23 = scmp.ne.s32.totalorder %s18, %s20
    %p24 = scmp.eq.s32.totalorder %s10, 0
    %p25 = por %p23, %p24
    %p26 = scmp.ne.s32.totalorder %s18, %s20
    %p27 = scmp.eq.s32.totalorder %s15, 1
    %p28 = por %p26, %p27
    %p29 = scmp.ne.s32.totalorder %s20, %s21
    %p30 = scmp.eq.s32.totalorder %s15, 0
    %p31 = por %p29, %p30
    %p32 = scmp.ne.s32.totalorder %s20, %s21
    %p33 = scmp.eq.s32.totalorder %s16, 1
    %p34 = por %p32, %p33
    %p36 = scmp.ne.s32.totalorder %s21, %s35
    %p37 = scmp.eq.s32.totalorder %s16, 0
    %p38 = por %p36, %p37
    %s40 = sadd.s32 %s39, 1
    %p43 = scmp.eq.s32.totalorder %s10, 1
    %p44 = scmp.ne.s32.totalorder %s39, %s41
    %p45 = scmp.eq.s32.totalorder %s10, 0
    %p46 = por %p44, %p45
    %p47 = scmp.ne.s32.totalorder %s39, %s41
    %p48 = scmp.eq.s32.totalorder %s15, 1
    %p49 = por %p47, %p48
    %p50 = scmp.ne.s32.totalorder %s41, %s42
    %p51 = scmp.eq.s32.totalorder %s15, 0
    %p52 = por %p50, %p51
    %p53 = scmp.ne.s32.totalorder %s41, %s42
    %p54 = scmp.eq.s32.totalorder %s16, 1
    %p55 = por %p53, %p54
    %p57 = scmp.ne.s32.totalorder %s42, %s56
    %p58 = scmp.eq.s32.totalorder %s16, 0
    %p59 = por %p57, %p58
    %s61 = sadd.s32 %s60, 1
    %p64 = scmp.eq.s32.totalorder %s10, 1
    %p65 = scmp.ne.s32.totalorder %s60, %s62
    %p66 = scmp.eq.s32.totalorder %s10, 0
    %p67 = por %p65, %p66
    %p68 = scmp.ne.s32.totalorder %s60, %s62
    %p69 = scmp.eq.s32.totalorder %s15, 1
    %p70 = por %p68, %p69
    %p71 = scmp.ne.s32.totalorder %s62, %s63
    %p72 = scmp.eq.s32.totalorder %s15, 0
    %p73 = por %p71, %p72
    %p74 = scmp.ne.s32.totalorder %s62, %s63
    %p75 = scmp.eq.s32.totalorder %s16, 1
    %p76 = por %p74, %p75
    %p78 = scmp.ne.s32.totalorder %s63, %s77
    %p79 = scmp.eq.s32.totalorder %s16, 0
    %p80 = por %p78, %p79
    %s81 = ssub.s32 %s10, %s17
    %p82 = scmp.eq.s32.totalorder %s81, 0
    %s84 = sadd.s32 %s83, 1
    %s85 = scalar_select %p82, %s83, %s84
    %p88 = pneg %p82
    %p89 = scmp.eq.s32.totalorder %s10, 1
    %p90 = por %p88, %p89
    %p91 = scmp.ne.s32.totalorder %s83, %s86
    %p92 = scmp.eq.s32.totalorder %s10, 0
    %p93 = por %p91, %p92
    %p94 = scmp.ne.s32.totalorder %s83, %s86
    %p95 = scmp.eq.s32.totalorder %s15, 1
    %p96 = por %p94, %p95
    %p97 = scmp.ne.s32.totalorder %s86, %s87
    %p98 = scmp.eq.s32.totalorder %s15, 0
    %p99 = por %p97, %p98
    %p100 = scmp.ne.s32.totalorder %s86, %s87
    %p101 = scmp.eq.s32.totalorder %s16, 1
    %p102 = por %p100, %p101
    %p104 = scmp.ne.s32.totalorder %s87, %s103
    %p105 = scmp.eq.s32.totalorder %s16, 0
    %p106 = por %p104, %p105
    %s107 = ssub.s32 %s10, %s17
    %p108 = scmp.eq.s32.totalorder %s107, 0
    %s110 = sadd.s32 %s109, 1
    %s111 = scalar_select %p108, %s109, %s110
    %p114 = pneg %p108
    %p115 = scmp.eq.s32.totalorder %s10, 1
    %p116 = por %p114, %p115
    %p117 = scmp.ne.s32.totalorder %s109, %s112
    %p118 = scmp.eq.s32.totalorder %s10, 0
    %p119 = por %p117, %p118
    %p120 = scmp.ne.s32.totalorder %s109, %s112
    %p121 = scmp.eq.s32.totalorder %s15, 1
    %p122 = por %p120, %p121
    %p123 = scmp.ne.s32.totalorder %s112, %s113
    %p124 = scmp.eq.s32.totalorder %s15, 0
    %p125 = por %p123, %p124
    %p126 = scmp.ne.s32.totalorder %s112, %s113
    %p127 = scmp.eq.s32.totalorder %s16, 1
    %p128 = por %p126, %p127
    %p130 = scmp.ne.s32.totalorder %s113, %s129
    %p131 = scmp.eq.s32.totalorder %s16, 0
    %p132 = por %p130, %p131
    %p133 = scmp.le.s32.totalorder 1, %s10
    %p134 = scmp.lt.s32.totalorder %s10, 3
    %p135 = pnand %p133, %p134
    %p136 = pneg %p135
    // Predicated region
    $region9: #{tpu_custom_call.1} parent=5 // pred_check
      _
    $region10: #{tpu_custom_call.1} parent=5 // pred_check_branch
      %138 = sbr.rel (%p135) target = $region12
    $region11: #{tpu_custom_call.1} parent=5 // pred_region
      %s139 = ssub.s32 %s10, 1
      // Predicated region
      $region13: #{tpu_custom_call.1} parent=11 // pred_check
        %p140 = pneg %p31
      $region14: #{tpu_custom_call.1} parent=11 // pred_check_branch
        %142 = sbr.rel (%p140) target = $region16
      $region15: #{tpu_custom_call.1} parent=11 // pred_region
        _
      $region16: #{tpu_custom_call.1} parent=11 // pred_fallthru
        _
      // Predicated region
      $region17: #{tpu_custom_call.1} parent=11 // pred_check
        %p143 = pneg %p52
      $region18: #{tpu_custom_call.1} parent=11 // pred_check_branch
        %145 = sbr.rel (%p143) target = $region20
      $region19: #{tpu_custom_call.1} parent=11 // pred_region
        _
      $region20: #{tpu_custom_call.1} parent=11 // pred_fallthru
        _
      // Predicated region
      $region21: #{tpu_custom_call.1} parent=11 // pred_check
        %p146 = pneg %p73
      $region22: #{tpu_custom_call.1} parent=11 // pred_check_branch
        %148 = sbr.rel (%p146) target = $region24
      $region23: #{tpu_custom_call.1} parent=11 // pred_region
        _
      $region24: #{tpu_custom_call.1} parent=11 // pred_fallthru
        _
    $region12: #{tpu_custom_call.1} parent=5 // pred_fallthru
      _
    %p149 = scmp.lt.s32.totalorder %s10, 2
    // Predicated region
    $region25: #{tpu_custom_call.1} parent=5 // pred_check
      %p150 = pneg %p149
    $region26: #{tpu_custom_call.1} parent=5 // pred_check_branch
      %152 = sbr.rel (%p150) target = $region28
    $region27: #{tpu_custom_call.1} parent=5 // pred_region
      // Predicated region
      $region29: #{tpu_custom_call.1} parent=27 // pred_check
        %p153 = pneg %p93
      $region30: #{tpu_custom_call.1} parent=27 // pred_check_branch
        %155 = sbr.rel (%p153) target = $region32
      $region31: #{tpu_custom_call.1} parent=27 // pred_region
        %p156 = scmp.lt.s32.totalorder %s10, 1
        %s157 = scalar_select %p156, %s10, 1
        %s158 = smul.addr %s157, 8
        %s159 = scalar_lea.vmem %s3, %s158
      $region32: #{tpu_custom_call.1} parent=27 // pred_fallthru
        _
    $region28: #{tpu_custom_call.1} parent=5 // pred_fallthru
      _
    %p160 = scmp.le.s32.totalorder 1, %s10
    %p161 = scmp.lt.s32.totalorder %s10, 3
    %p162 = pnand %p160, %p161
    %p163 = pneg %p162
    // Predicated region
    $region33: #{tpu_custom_call.1} parent=5 // pred_check
      _
    $region34: #{tpu_custom_call.1} parent=5 // pred_check_branch
      %165 = sbr.rel (%p162) target = $region36
    $region35: #{tpu_custom_call.1} parent=5 // pred_region
      %s166 = ssub.s32 %s10, 1
      %p167 = pneg %p31
      %p168 = pneg %p28
      %p169 = pneg %p52
      %p170 = pneg %p49
      %p171 = pneg %p73
      %p172 = pneg %p70
      %p173 = scmp.lt.s32.totalorder %s15, 1
      %s174 = scalar_select %p173, %s15, 1
      %s175 = smul.addr %s174, 8
      %s176 = scalar_lea.vmem %s3, %s175
      %p177 = pneg %p99
      %p178 = pneg %p96
      %p179 = pneg %p125
      %p180 = pneg %p122
      %s181 = smul.u32 4, %s15
      %p182 = scmp.lt.s32.totalorder %s181, 7
      %s183 = scalar_select %p182, %s181, 7
      %s184 = smul.addr %s183, 8
      %s185 = scalar_lea.vmem %s4, %s184
      %p186 = scmp.lt.s32.totalorder %s15, 1
      %s187 = scalar_select %p186, %s15, 1
      %s188 = smul.addr %s187, 8
      %s189 = scalar_lea.vmem %s3, %s188
      %s190 = smul.u32 4, %s15
      %p191 = scmp.lt.s32.totalorder %s190, 7
      %s192 = scalar_select %p191, %s190, 7
      %s193 = smul.addr %s192, 8
      %s194 = scalar_lea.vmem %s4, %s193
      %s195 = smul.u32 4, %s15
      %s198 = smul.u32 %s15, 32
      %v199 = vld [vmem:[%s0] sm:$0xff]
      %v200 = vld [vmem:[%s0 + $0x8] sm:$0xff]
      %v201 = vld [vmem:[%s0 + $0x10] sm:$0xff]
      %v202 = vld [vmem:[%s0 + $0x18] sm:$0xff]
      %v203 = vld [vmem:[%s0 + $0x20] sm:$0xff]
      %v204 = vld [vmem:[%s0 + $0x28] sm:$0xff]
      %v205 = vld [vmem:[%s0 + $0x30] sm:$0xff]
      %v206 = vld [vmem:[%s0 + $0x38] sm:$0xff]
      %v207 = vld [vmem:[%s1] sm:$0xff]
      %v208 = vld [vmem:[%s2] sm:$0xff]
      %v209 = vld [vmem:[%s2 + $0x8] sm:$0xff]
      %v210 = vld [vmem:[%s2 + $0x10] sm:$0xff]
      %v211 = vld [vmem:[%s2 + $0x18] sm:$0xff]
      %vm212 = vcmask 64512
      %v214 = vsel %vm212, %v199, 0
      %v217 = vsel %vm212, %v200, 0
      %v220 = vsel %vm212, %v201, 0
      %v223 = vsel %vm212, %v202, 0
      %v226 = vsel %vm212, %v203, 0
      %v229 = vsel %vm212, %v204, 0
      %v232 = vsel %vm212, %v205, 0
      %v235 = vsel %vm212, %v206, 0
      %237 = vmatprep.subr.mxu0 0.0
      %238 = vmatpush1.msra.mxu0 %v207
      %239 = vmatprep.subr.mxu0 0.0
      %240 = vmatpush1.msra.mxu0 0.0
      %241 = vmatprep.subr.mxu0 0.0
      %242 = vmatpush1.msra.mxu0 0.0
      %243 = vmatprep.subr.mxu0 0.0
      %244 = vmatpush1.msra.mxu0 0.0
      %245 = vmatprep.subr.mxu0 0.0
      %246 = vmatpush1.msra.mxu0 0.0
      %247 = vmatprep.subr.mxu0 0.0
      %248 = vmatpush1.msra.mxu0 0.0
      %249 = vmatprep.subr.mxu0 0.0
      %250 = vmatpush1.msra.mxu0 0.0
      %251 = vmatprep.subr.mxu0 0.0
      %252 = vmatpush1.msra.mxu0 0.0
      %253 = vmatprep.subr.mxu0 0.0
      %254 = vmatpush1.msra.mxu0 0.0
      %255 = vmatprep.subr.mxu0 0.0
      %256 = vmatpush1.msra.mxu0 0.0
      %257 = vmatprep.subr.mxu0 0.0
      %258 = vmatpush1.msra.mxu0 0.0
      %259 = vmatprep.subr.mxu0 0.0
      %260 = vmatpush1.msra.mxu0 0.0
      %261 = vmatprep.subr.mxu0 0.0
      %262 = vmatpush1.msra.mxu0 0.0
      %263 = vmatprep.subr.mxu0 0.0
      %264 = vmatpush1.msra.mxu0 0.0
      %265 = vmatprep.subr.mxu0 0.0
      %266 = vmatpush1.msra.mxu0 0.0
      %267 = vmatprep.subr.mxu0 0.0
      %268 = vmatpush1.msra.mxu0 0.0
      %269 = vmatprep.subr.mxu0 0.0
      %270 = vmatpush1.msra.mxu0 0.0
      %271 = vmatprep.subr.mxu0 0.0
      %272 = vmatpush1.msra.mxu0 0.0
      %273 = vmatprep.subr.mxu0 0.0
      %274 = vmatpush1.msra.mxu0 0.0
      %275 = vmatprep.subr.mxu0 0.0
      %276 = vmatpush1.msra.mxu0 0.0
      %277 = vmatprep.subr.mxu0 0.0
      %278 = vmatpush1.msra.mxu0 0.0
      %279 = vmatprep.subr.mxu0 0.0
      %280 = vmatpush1.msra.mxu0 0.0
      %281 = vmatprep.subr.mxu0 0.0
      %282 = vmatpush1.msra.mxu0 0.0
      %283 = vmatprep.subr.mxu0 0.0
      %284 = vmatpush1.msra.mxu0 0.0
      %285 = vmatprep.subr.mxu0 0.0
      %286 = vmatpush1.msra.mxu0 0.0
      %287 = vmatprep.subr.mxu0 0.0
      %288 = vmatpush1.msra.mxu0 0.0
      %289 = vmatprep.subr.mxu0 0.0
      %290 = vmatpush1.msra.mxu0 0.0
      %291 = vmatprep.subr.mxu0 0.0
      %292 = vmatpush1.msra.mxu0 0.0
      %293 = vmatprep.subr.mxu0 0.0
      %294 = vmatpush1.msra.mxu0 0.0
      %295 = vmatprep.subr.mxu0 0.0
      %296 = vmatpush1.msra.mxu0 0.0
      %297 = vmatprep.subr.mxu0 0.0
      %298 = vmatpush1.msra.mxu0 0.0
      %299 = vmatprep.subr.mxu0 0.0
      %300 = vmatpush1.msra.mxu0 0.0
      %301 = vmatprep.mubr.f32.mxu0 0.0
      %302 = vmatmul.mubr.f32.gmra.mrb[0].mxu0 %v214
      %v303 = vpop.f32.mrb[0].mxu0
      %v304 = vadd.f32 0.0, %v303
      %v305 = vpop.f32.mrb[0].mxu0
      %306 = vmatprep.mubr.f32.mxu0 0.0
      %307 = vmatmul.mubr.f32.gmra.mrb[0].mxu0 %v217
      %v308 = vpop.f32.mrb[0].mxu0
      %v309 = vadd.f32 0.0, %v308
      %v310 = vpop.f32.mrb[0].mxu0
      %311 = vmatprep.mubr.f32.mxu0 0.0
      %312 = vmatmul.mubr.f32.gmra.mrb[0].mxu0 %v220
      %v313 = vpop.f32.mrb[0].mxu0
      %v314 = vadd.f32 0.0, %v313
      %v315 = vpop.f32.mrb[0].mxu0
      %316 = vmatprep.mubr.f32.mxu0 0.0
      %317 = vmatmul.mubr.f32.gmra.mrb[0].mxu0 %v223
      %v318 = vpop.f32.mrb[0].mxu0
      %v319 = vadd.f32 0.0, %v318
      %v320 = vpop.f32.mrb[0].mxu0
      %321 = vmatprep.mubr.f32.mxu0 0.0
      %322 = vmatmul.mubr.f32.gmra.mrb[0].mxu0 %v226
      %v323 = vpop.f32.mrb[0].mxu0
      %v324 = vadd.f32 0.0, %v323
      %v325 = vpop.f32.mrb[0].mxu0
      %326 = vmatprep.mubr.f32.mxu0 0.0
      %327 = vmatmul.mubr.f32.gmra.mrb[0].mxu0 %v229
      %v328 = vpop.f32.mrb[0].mxu0
      %v329 = vadd.f32 0.0, %v328
      %v330 = vpop.f32.mrb[0].mxu0
      %331 = vmatprep.mubr.f32.mxu0 0.0
      %332 = vmatmul.mubr.f32.gmra.mrb[0].mxu0 %v232
      %v333 = vpop.f32.mrb[0].mxu0
      %v334 = vadd.f32 0.0, %v333
      %v335 = vpop.f32.mrb[0].mxu0
      %336 = vmatprep.mubr.f32.mxu0 0.0
      %337 = vmatmul.mubr.f32.gmra.mrb[0].mxu0 %v235
      %v338 = vpop.f32.mrb[0].mxu0
      %v339 = vadd.f32 0.0, %v338
      %v340 = vpop.f32.mrb[0].mxu0
      %341 = vdwg.mxu0
      %vm342 = vcmask 261120
      %v344 = vsel %vm342, %v304, 0
      %v347 = vsel %vm342, %v309, 0
      %v350 = vsel %vm342, %v314, 0
      %v353 = vsel %vm342, %v319, 0
      %v356 = vsel %vm342, %v324, 0
      %v359 = vsel %vm342, %v329, 0
      %v362 = vsel %vm342, %v334, 0
      %v365 = vsel %vm342, %v339, 0
      %367 = vmatprep.subr.mxu0 0.0
      %368 = vmatpush1.msra.mxu0 %v208
      %369 = vmatprep.subr.mxu0 0.0
      %370 = vmatpush1.msra.mxu0 %v209
      %371 = vmatprep.subr.mxu0 0.0
      %372 = vmatpush1.msra.mxu0 %v210
      %373 = vmatprep.subr.mxu0 0.0
      %374 = vmatpush1.msra.mxu0 %v211
      %375 = vmatprep.subr.mxu0 0.0
      %376 = vmatpush1.msra.mxu0 0.0
      %377 = vmatprep.subr.mxu0 0.0
      %378 = vmatpush1.msra.mxu0 0.0
      %379 = vmatprep.subr.mxu0 0.0
      %380 = vmatpush1.msra.mxu0 0.0
      %381 = vmatprep.subr.mxu0 0.0
      %382 = vmatpush1.msra.mxu0 0.0
      %383 = vmatprep.subr.mxu0 0.0
      %384 = vmatpush1.msra.mxu0 0.0
      %385 = vmatprep.subr.mxu0 0.0
      %386 = vmatpush1.msra.mxu0 0.0
      %387 = vmatprep.subr.mxu0 0.0
      %388 = vmatpush1.msra.mxu0 0.0
      %389 = vmatprep.subr.mxu0 0.0
      %390 = vmatpush1.msra.mxu0 0.0
      %391 = vmatprep.subr.mxu0 0.0
      %392 = vmatpush1.msra.mxu0 0.0
      %393 = vmatprep.subr.mxu0 0.0
      %394 = vmatpush1.msra.mxu0 0.0
      %395 = vmatprep.subr.mxu0 0.0
      %396 = vmatpush1.msra.mxu0 0.0
      %397 = vmatprep.subr.mxu0 0.0
      %398 = vmatpush1.msra.mxu0 0.0
      %399 = vmatprep.subr.mxu0 0.0
      %400 = vmatpush1.msra.mxu0 0.0
      %401 = vmatprep.subr.mxu0 0.0
      %402 = vmatpush1.msra.mxu0 0.0
      %403 = vmatprep.subr.mxu0 0.0
      %404 = vmatpush1.msra.mxu0 0.0
      %405 = vmatprep.subr.mxu0 0.0
      %406 = vmatpush1.msra.mxu0 0.0
      %407 = vmatprep.subr.mxu0 0.0
      %408 = vmatpush1.msra.mxu0 0.0
      %409 = vmatprep.subr.mxu0 0.0
      %410 = vmatpush1.msra.mxu0 0.0
      %411 = vmatprep.subr.mxu0 0.0
      %412 = vmatpush1.msra.mxu0 0.0
      %413 = vmatprep.subr.mxu0 0.0
      %414 = vmatpush1.msra.mxu0 0.0
      %415 = vmatprep.subr.mxu0 0.0
      %416 = vmatpush1.msra.mxu0 0.0
      %417 = vmatprep.subr.mxu0 0.0
      %418 = vmatpush1.msra.mxu0 0.0
      %419 = vmatprep.subr.mxu0 0.0
      %420 = vmatpush1.msra.mxu0 0.0
      %421 = vmatprep.subr.mxu0 0.0
      %422 = vmatpush1.msra.mxu0 0.0
      %423 = vmatprep.subr.mxu0 0.0
      %424 = vmatpush1.msra.mxu0 0.0
      %425 = vmatprep.subr.mxu0 0.0
      %426 = vmatpush1.msra.mxu0 0.0
      %427 = vmatprep.subr.mxu0 0.0
      %428 = vmatpush1.msra.mxu0 0.0
      %429 = vmatprep.subr.mxu0 0.0
      %430 = vmatpush1.msra.mxu0 0.0
      %431 = vmatprep.mubr.f32.mxu0 0.0
      %432 = vmatmul.mubr.f32.gmra.mrb[0].mxu0 %v344
      %v433 = vpop.f32.mrb[0].mxu0
      %v434 = vadd.f32 0.0, %v433
      %v435 = vpop.f32.mrb[0].mxu0
      %436 = vmatprep.mubr.f32.mxu0 0.0
      %437 = vmatmul.mubr.f32.gmra.mrb[0].mxu0 %v347
      %v438 = vpop.f32.mrb[0].mxu0
      %v439 = vadd.f32 0.0, %v438
      %v440 = vpop.f32.mrb[0].mxu0
      %441 = vmatprep.mubr.f32.mxu0 0.0
      %442 = vmatmul.mubr.f32.gmra.mrb[0].mxu0 %v350
      %v443 = vpop.f32.mrb[0].mxu0
      %v444 = vadd.f32 0.0, %v443
      %v445 = vpop.f32.mrb[0].mxu0
      %446 = vmatprep.mubr.f32.mxu0 0.0
      %447 = vmatmul.mubr.f32.gmra.mrb[0].mxu0 %v353
      %v448 = vpop.f32.mrb[0].mxu0
      %v449 = vadd.f32 0.0, %v448
      %v450 = vpop.f32.mrb[0].mxu0
      %451 = vmatprep.mubr.f32.mxu0 0.0
      %452 = vmatmul.mubr.f32.gmra.mrb[0].mxu0 %v356
      %v453 = vpop.f32.mrb[0].mxu0
      %v454 = vadd.f32 0.0, %v453
      %v455 = vpop.f32.mrb[0].mxu0
      %456 = vmatprep.mubr.f32.mxu0 0.0
      %457 = vmatmul.mubr.f32.gmra.mrb[0].mxu0 %v359
      %v458 = vpop.f32.mrb[0].mxu0
      %v459 = vadd.f32 0.0, %v458
      %v460 = vpop.f32.mrb[0].mxu0
      %461 = vmatprep.mubr.f32.mxu0 0.0
      %462 = vmatmul.mubr.f32.gmra.mrb[0].mxu0 %v362
      %v463 = vpop.f32.mrb[0].mxu0
      %v464 = vadd.f32 0.0, %v463
      %v465 = vpop.f32.mrb[0].mxu0
      %466 = vmatprep.mubr.f32.mxu0 0.0
      %467 = vmatmul.mubr.f32.gmra.mrb[0].mxu0 %v365
      %v468 = vpop.f32.mrb[0].mxu0
      %v469 = vadd.f32 0.0, %v468
      %v470 = vpop.f32.mrb[0].mxu0
      %471 = vdwg.mxu0
      %472 = vxpose.xlu0.b32.start [1/16] %v434, 128
      %473 = vxpose.xlu0.b32.cont [2/16] %v439, 128
      %474 = vxpose.xlu0.b32.cont [3/16] %v444, 128
      %475 = vxpose.xlu0.b32.cont [4/16] %v449, 128
      %476 = vxpose.xlu0.b32.cont [5/16] %v454, 128
      %477 = vxpose.xlu0.b32.cont [6/16] %v459, 128
      %478 = vxpose.xlu0.b32.cont [7/16] %v464, 128
      %479 = vxpose.xlu0.b32.cont [8/16] %v469, 128
      %480 = vxpose.xlu0.b32.cont [9/16] 0.0, 128
      %481 = vxpose.xlu0.b32.cont [10/16] 0.0, 128
      %482 = vxpose.xlu0.b32.cont [11/16] 0.0, 128
      %483 = vxpose.xlu0.b32.cont [12/16] 0.0, 128
      %484 = vxpose.xlu0.b32.cont [13/16] 0.0, 128
      %485 = vxpose.xlu0.b32.cont [14/16] 0.0, 128
      %486 = vxpose.xlu0.b32.cont [15/16] 0.0, 128
      %487 = vxpose.xlu0.b32.end [16/16] 0.0, 128
      %v488 = vpop.trf.xlu0
      %v489 = vpop.trf.xlu0
      %v490 = vpop.trf.xlu0
      %v491 = vpop.trf.xlu0
      %v492 = vpop.trf.xlu0
      %v493 = vpop.trf.xlu0
      %v494 = vpop.trf.xlu0
      %v495 = vpop.trf.xlu0
      %v496 = vpop.trf.xlu0
      %v497 = vpop.trf.xlu0
      %v498 = vpop.trf.xlu0
      %v499 = vpop.trf.xlu0
      %v500 = vpop.trf.xlu0
      %v501 = vpop.trf.xlu0
      %v502 = vpop.trf.xlu0
      %v503 = vpop.trf.xlu0
      %s504 = scalar_lea.vmem %s0, %s198
      %v505 = vld [vmem:[%s504] sm:$0xff]
      %v506 = vld [vmem:[%s504 + $0x8] sm:$0xff]
      %v507 = vld [vmem:[%s504 + $0x10] sm:$0xff]
      %v508 = vld [vmem:[%s504 + $0x18] sm:$0xff]
      %v510 = vsel %vm212, %v505, 0
      %v513 = vsel %vm212, %v506, 0
      %v516 = vsel %vm212, %v507, 0
      %v519 = vsel %vm212, %v508, 0
      %521 = vmatprep.subr.mxu0 0.0
      %522 = vmatpush1.msra.mxu0 %v207
      %523 = vmatprep.subr.mxu0 0.0
      %524 = vmatpush1.msra.mxu0 0.0
      %525 = vmatprep.subr.mxu0 0.0
      %526 = vmatpush1.msra.mxu0 0.0
      %527 = vmatprep.subr.mxu0 0.0
      %528 = vmatpush1.msra.mxu0 0.0
      %529 = vmatprep.subr.mxu0 0.0
      %530 = vmatpush1.msra.mxu0 0.0
      %531 = vmatprep.subr.mxu0 0.0
      %532 = vmatpush1.msra.mxu0 0.0
      %533 = vmatprep.subr.mxu0 0.0
      %534 = vmatpush1.msra.mxu0 0.0
      %535 = vmatprep.subr.mxu0 0.0
      %536 = vmatpush1.msra.mxu0 0.0
      %537 = vmatprep.subr.mxu0 0.0
      %538 = vmatpush1.msra.mxu0 0.0
      %539 = vmatprep.subr.mxu0 0.0
      %540 = vmatpush1.msra.mxu0 0.0
      %541 = vmatprep.subr.mxu0 0.0
      %542 = vmatpush1.msra.mxu0 0.0
      %543 = vmatprep.subr.mxu0 0.0
      %544 = vmatpush1.msra.mxu0 0.0
      %545 = vmatprep.subr.mxu0 0.0
      %546 = vmatpush1.msra.mxu0 0.0
      %547 = vmatprep.subr.mxu0 0.0
      %548 = vmatpush1.msra.mxu0 0.0
      %549 = vmatprep.subr.mxu0 0.0
      %550 = vmatpush1.msra.mxu0 0.0
      %551 = vmatprep.subr.mxu0 0.0
      %552 = vmatpush1.msra.mxu0 0.0
      %553 = vmatprep.subr.mxu0 0.0
      %554 = vmatpush1.msra.mxu0 0.0
      %555 = vmatprep.subr.mxu0 0.0
      %556 = vmatpush1.msra.mxu0 0.0
      %557 = vmatprep.subr.mxu0 0.0
      %558 = vmatpush1.msra.mxu0 0.0
      %559 = vmatprep.subr.mxu0 0.0
      %560 = vmatpush1.msra.mxu0 0.0
      %561 = vmatprep.subr.mxu0 0.0
      %562 = vmatpush1.msra.mxu0 0.0
      %563 = vmatprep.subr.mxu0 0.0
      %564 = vmatpush1.msra.mxu0 0.0
      %565 = vmatprep.subr.mxu0 0.0
      %566 = vmatpush1.msra.mxu0 0.0
      %567 = vmatprep.subr.mxu0 0.0
      %568 = vmatpush1.msra.mxu0 0.0
      %569 = vmatprep.subr.mxu0 0.0
      %570 = vmatpush1.msra.mxu0 0.0
      %571 = vmatprep.subr.mxu0 0.0
      %572 = vmatpush1.msra.mxu0 0.0
      %573 = vmatprep.subr.mxu0 0.0
      %574 = vmatpush1.msra.mxu0 0.0
      %575 = vmatprep.subr.mxu0 0.0
      %576 = vmatpush1.msra.mxu0 0.0
      %577 = vmatprep.subr.mxu0 0.0
      %578 = vmatpush1.msra.mxu0 0.0
      %579 = vmatprep.subr.mxu0 0.0
      %580 = vmatpush1.msra.mxu0 0.0
      %581 = vmatprep.subr.mxu0 0.0
      %582 = vmatpush1.msra.mxu0 0.0
      %583 = vmatprep.subr.mxu0 0.0
      %584 = vmatpush1.msra.mxu0 0.0
      %585 = vmatprep.mubr.f32.mxu0 0.0
      %586 = vmatmul.mubr.f32.gmra.mrb[0].mxu0 %v510
      %v587 = vpop.f32.mrb[0].mxu0
      %v588 = vadd.f32 0.0, %v587
      %v589 = vpop.f32.mrb[0].mxu0
      %590 = vmatprep.mubr.f32.mxu0 0.0
      %591 = vmatmul.mubr.f32.gmra.mrb[0].mxu0 %v513
      %v592 = vpop.f32.mrb[0].mxu0
      %v593 = vadd.f32 0.0, %v592
      %v594 = vpop.f32.mrb[0].mxu0
      %595 = vmatprep.mubr.f32.mxu0 0.0
      %596 = vmatmul.mubr.f32.gmra.mrb[0].mxu0 %v516
      %v597 = vpop.f32.mrb[0].mxu0
      %v598 = vadd.f32 0.0, %v597
      %v599 = vpop.f32.mrb[0].mxu0
      %600 = vmatprep.mubr.f32.mxu0 0.0
      %601 = vmatmul.mubr.f32.gmra.mrb[0].mxu0 %v519
      %v602 = vpop.f32.mrb[0].mxu0
      %v603 = vadd.f32 0.0, %v602
      %v604 = vpop.f32.mrb[0].mxu0
      %605 = vdwg.mxu0
      %v607 = vsel %vm342, %v588, 0
      %v610 = vsel %vm342, %v593, 0
      %v613 = vsel %vm342, %v598, 0
      %v616 = vsel %vm342, %v603, 0
      %618 = vmatprep.subr.mxu0 0.0
      %619 = vmatpush1.msra.mxu0 %v208
      %620 = vmatprep.subr.mxu0 0.0
      %621 = vmatpush1.msra.mxu0 %v209
      %622 = vmatprep.subr.mxu0 0.0
      %623 = vmatpush1.msra.mxu0 %v210
      %624 = vmatprep.subr.mxu0 0.0
      %625 = vmatpush1.msra.mxu0 %v211
      %626 = vmatprep.subr.mxu0 0.0
      %627 = vmatpush1.msra.mxu0 0.0
      %628 = vmatprep.subr.mxu0 0.0
      %629 = vmatpush1.msra.mxu0 0.0
      %630 = vmatprep.subr.mxu0 0.0
      %631 = vmatpush1.msra.mxu0 0.0
      %632 = vmatprep.subr.mxu0 0.0
      %633 = vmatpush1.msra.mxu0 0.0
      %634 = vmatprep.subr.mxu0 0.0
      %635 = vmatpush1.msra.mxu0 0.0
      %636 = vmatprep.subr.mxu0 0.0
      %637 = vmatpush1.msra.mxu0 0.0
      %638 = vmatprep.subr.mxu0 0.0
      %639 = vmatpush1.msra.mxu0 0.0
      %640 = vmatprep.subr.mxu0 0.0
      %641 = vmatpush1.msra.mxu0 0.0
      %642 = vmatprep.subr.mxu0 0.0
      %643 = vmatpush1.msra.mxu0 0.0
      %644 = vmatprep.subr.mxu0 0.0
      %645 = vmatpush1.msra.mxu0 0.0
      %646 = vmatprep.subr.mxu0 0.0
      %647 = vmatpush1.msra.mxu0 0.0
      %648 = vmatprep.subr.mxu0 0.0
      %649 = vmatpush1.msra.mxu0 0.0
      %650 = vmatprep.subr.mxu0 0.0
      %651 = vmatpush1.msra.mxu0 0.0
      %652 = vmatprep.subr.mxu0 0.0
      %653 = vmatpush1.msra.mxu0 0.0
      %654 = vmatprep.subr.mxu0 0.0
      %655 = vmatpush1.msra.mxu0 0.0
      %656 = vmatprep.subr.mxu0 0.0
      %657 = vmatpush1.msra.mxu0 0.0
      %658 = vmatprep.subr.mxu0 0.0
      %659 = vmatpush1.msra.mxu0 0.0
      %660 = vmatprep.subr.mxu0 0.0
      %661 = vmatpush1.msra.mxu0 0.0
      %662 = vmatprep.subr.mxu0 0.0
      %663 = vmatpush1.msra.mxu0 0.0
      %664 = vmatprep.subr.mxu0 0.0
      %665 = vmatpush1.msra.mxu0 0.0
      %666 = vmatprep.subr.mxu0 0.0
      %667 = vmatpush1.msra.mxu0 0.0
      %668 = vmatprep.subr.mxu0 0.0
      %669 = vmatpush1.msra.mxu0 0.0
      %670 = vmatprep.subr.mxu0 0.0
      %671 = vmatpush1.msra.mxu0 0.0
      %672 = vmatprep.subr.mxu0 0.0
      %673 = vmatpush1.msra.mxu0 0.0
      %674 = vmatprep.subr.mxu0 0.0
      %675 = vmatpush1.msra.mxu0 0.0
      %676 = vmatprep.subr.mxu0 0.0
      %677 = vmatpush1.msra.mxu0 0.0
      %678 = vmatprep.subr.mxu0 0.0
      %679 = vmatpush1.msra.mxu0 0.0
      %680 = vmatprep.subr.mxu0 0.0
      %681 = vmatpush1.msra.mxu0 0.0
      %682 = vmatprep.mubr.f32.mxu0 0.0
      %683 = vmatmul.mubr.f32.gmra.mrb[0].mxu0 %v607
      %v684 = vpop.f32.mrb[0].mxu0
      %v685 = vadd.f32 0.0, %v684
      %v686 = vpop.f32.mrb[0].mxu0
      %687 = vmatprep.mubr.f32.mxu0 0.0
      %688 = vmatmul.mubr.f32.gmra.mrb[0].mxu0 %v610
      %v689 = vpop.f32.mrb[0].mxu0
      %v690 = vadd.f32 0.0, %v689
      %v691 = vpop.f32.mrb[0].mxu0
      %692 = vmatprep.mubr.f32.mxu0 0.0
      %693 = vmatmul.mubr.f32.gmra.mrb[0].mxu0 %v613
      %v694 = vpop.f32.mrb[0].mxu0
      %v695 = vadd.f32 0.0, %v694
      %v696 = vpop.f32.mrb[0].mxu0
      %697 = vmatprep.mubr.f32.mxu0 0.0
      %698 = vmatmul.mubr.f32.gmra.mrb[0].mxu0 %v616
      %v699 = vpop.f32.mrb[0].mxu0
      %v700 = vadd.f32 0.0, %v699
      %v701 = vpop.f32.mrb[0].mxu0
      %702 = vdwg.mxu0
      %v703 = vld [vmem:[%s189] sm:$0xff]
      %vm704 = vnez %v703
      %706 = vset.pattern.permute.xlu0 4
      %707 = vperm.xlu0 %706, %v685
      %v708 = vpop.permute.xlu0 %707
      %711 = vset.pattern.permute.xlu0 4
      %712 = vperm.xlu0 %711, %v690
      %v713 = vpop.permute.xlu0 %712
      %716 = vset.pattern.permute.xlu0 4
      %717 = vperm.xlu0 %716, %v695
      %v718 = vpop.permute.xlu0 %717
      %721 = vset.pattern.permute.xlu0 4
      %722 = vperm.xlu0 %721, %v700
      %v723 = vpop.permute.xlu0 %722
      %v725 = vlaneseq
      %v726 = vshrl.u32 %v725, 7
      %v727 = vsub.s32 0, %v726
      %v728 = vrot.slane %v488, %v727
      %v729 = vadd.f32 %v708, %v728
      %v730 = vadd.f32 %v713, %v728
      %v731 = vadd.f32 %v718, %v728
      %v732 = vadd.f32 %v723, %v728
      %vm733 = vcmp.ge.f32.partialorder %v729, 0.0
      %vm734 = vcmp.ge.f32.partialorder %v730, 0.0
      %vm735 = vcmp.ge.f32.partialorder %v731, 0.0
      %vm736 = vcmp.ge.f32.partialorder %v732, 0.0
      %v737 = vmul.f32 %v729, 0.01
      %v738 = vmul.f32 %v730, 0.01
      %v739 = vmul.f32 %v731, 0.01
      %v740 = vmul.f32 %v732, 0.01
      %v741 = vsel %vm733, %v729, %v737
      %v742 = vsel %vm734, %v730, %v738
      %v743 = vsel %vm735, %v731, %v739
      %v744 = vsel %vm736, %v732, %v740
      %v745 = vsel %vm704, 16843009, 0
      %v746 = vunpack.c.0.s8 %v745
      %v747 = vunpack.c.1.s8 %v745
      %v748 = vunpack.c.2.s8 %v745
      %v749 = vunpack.c.3.s8 %v745
      %v750 = vpack.c.b16 %v746, %v746
      %v751 = vpack.c.b8 %v750, %v750
      %v752 = vpack.c.b16 %v747, %v747
      %v753 = vpack.c.b8 %v752, %v752
      %v754 = vpack.c.b16 %v748, %v748
      %v755 = vpack.c.b8 %v754, %v754
      %v756 = vpack.c.b16 %v749, %v749
      %v757 = vpack.c.b8 %v756, %v756
      %vm758 = vnez %v751
      %vm759 = vnez %v753
      %vm760 = vnez %v755
      %vm761 = vnez %v757
      %v762 = vsel %vm758, 16843009, 0
      %v763 = vsel %vm759, 16843009, 0
      %v764 = vsel %vm760, 16843009, 0
      %v765 = vsel %vm761, 16843009, 0
      %v766 = vunpack.c.0.s8 %v762
      %v767 = vunpack.c.0.s8 %v763
      %v768 = vunpack.c.0.s8 %v764
      %v769 = vunpack.c.0.s8 %v765
      %vm770 = vcmp.ne.s32.totalorder %v766, 0
      %vm771 = vcmp.ne.s32.totalorder %v767, 0
      %vm772 = vcmp.ne.s32.totalorder %v768, 0
      %vm773 = vcmp.ne.s32.totalorder %v769, 0
      %v774 = vsel %vm770, %v741, -1e+30
      %v775 = vsel %vm771, %v742, -1e+30
      %v776 = vsel %vm772, %v743, -1e+30
      %v777 = vsel %vm773, %v744, -1e+30
      %vm778 = vcmask 523264
      %v779 = vsel %vm778, %v774, -inf
      %780 = vmax.xlane.f32.xlu0 %v779
      %v781 = vpop.xlane.xlu0 %780
      %v782 = vsel %vm778, %v775, -inf
      %783 = vmax.xlane.f32.xlu0 %v782
      %v784 = vpop.xlane.xlu0 %783
      %v785 = vsel %vm778, %v776, -inf
      %786 = vmax.xlane.f32.xlu0 %v785
      %v787 = vpop.xlane.xlu0 %786
      %v788 = vsel %vm778, %v777, -inf
      %789 = vmax.xlane.f32.xlu0 %v788
      %v790 = vpop.xlane.xlu0 %789
      %v791 = vsub.f32 %v774, %v781
      %v792 = vsub.f32 %v775, %v784
      %v793 = vsub.f32 %v776, %v787
      %v794 = vsub.f32 %v777, %v790
      %v795 = vmul.f32 %v791, 1.442695
      %v796 = vpow.pop %v795
      %v797 = vmul.f32 %v792, 1.442695
      %v798 = vpow.pop %v797
      %v799 = vmul.f32 %v793, 1.442695
      %v800 = vpow.pop %v799
      %v801 = vmul.f32 %v794, 1.442695
      %v802 = vpow.pop %v801
      %v803 = vsel %vm778, %v796, 0.0
      %804 = vadd.xlane.f32.xlu0 %v803
      %v805 = vpop.xlane.xlu0 %804
      %v806 = vsel %vm778, %v798, 0.0
      %807 = vadd.xlane.f32.xlu0 %v806
      %v808 = vpop.xlane.xlu0 %807
      %v809 = vsel %vm778, %v800, 0.0
      %810 = vadd.xlane.f32.xlu0 %v809
      %v811 = vpop.xlane.xlu0 %810
      %v812 = vsel %vm778, %v802, 0.0
      %813 = vadd.xlane.f32.xlu0 %v812
      %v814 = vpop.xlane.xlu0 %813
      %v815 = vrcp.pop %v805
      %v816 = vmul.f32 %v796, %v815
      %v817 = vrcp.pop %v808
      %v818 = vmul.f32 %v798, %v817
      %v819 = vrcp.pop %v811
      %v820 = vmul.f32 %v800, %v819
      %v821 = vrcp.pop %v814
      %v822 = vmul.f32 %v802, %v821
      %v824 = vsel %vm778, %v816, 0
      %v827 = vsel %vm778, %v818, 0
      %v830 = vsel %vm778, %v820, 0
      %v833 = vsel %vm778, %v822, 0
      %835 = vmatprep.subr.mxu0 0.0
      %836 = vmatpush1.msra.mxu0 %v304
      %837 = vmatprep.subr.mxu0 0.0
      %838 = vmatpush1.msra.mxu0 %v309
      %839 = vmatprep.subr.mxu0 0.0
      %840 = vmatpush1.msra.mxu0 %v314
      %841 = vmatprep.subr.mxu0 0.0
      %842 = vmatpush1.msra.mxu0 %v319
      %843 = vmatprep.subr.mxu0 0.0
      %844 = vmatpush1.msra.mxu0 %v324
      %845 = vmatprep.subr.mxu0 0.0
      %846 = vmatpush1.msra.mxu0 %v329
      %847 = vmatprep.subr.mxu0 0.0
      %848 = vmatpush1.msra.mxu0 %v334
      %849 = vmatprep.subr.mxu0 0.0
      %850 = vmatpush1.msra.mxu0 %v339
      %851 = vmatprep.subr.mxu0 0.0
      %852 = vmatpush1.msra.mxu0 0.0
      %853 = vmatprep.subr.mxu0 0.0
      %854 = vmatpush1.msra.mxu0 0.0
      %855 = vmatprep.subr.mxu0 0.0
      %856 = vmatpush1.msra.mxu0 0.0
      %857 = vmatprep.subr.mxu0 0.0
      %858 = vmatpush1.msra.mxu0 0.0
      %859 = vmatprep.subr.mxu0 0.0
      %860 = vmatpush1.msra.mxu0 0.0
      %861 = vmatprep.subr.mxu0 0.0
      %862 = vmatpush1.msra.mxu0 0.0
      %863 = vmatprep.subr.mxu0 0.0
      %864 = vmatpush1.msra.mxu0 0.0
      %865 = vmatprep.subr.mxu0 0.0
      %866 = vmatpush1.msra.mxu0 0.0
      %867 = vmatprep.subr.mxu0 0.0
      %868 = vmatpush1.msra.mxu0 0.0
      %869 = vmatprep.subr.mxu0 0.0
      %870 = vmatpush1.msra.mxu0 0.0
      %871 = vmatprep.subr.mxu0 0.0
      %872 = vmatpush1.msra.mxu0 0.0
      %873 = vmatprep.subr.mxu0 0.0
      %874 = vmatpush1.msra.mxu0 0.0
      %875 = vmatprep.subr.mxu0 0.0
      %876 = vmatpush1.msra.mxu0 0.0
      %877 = vmatprep.subr.mxu0 0.0
      %878 = vmatpush1.msra.mxu0 0.0
      %879 = vmatprep.subr.mxu0 0.0
      %880 = vmatpush1.msra.mxu0 0.0
      %881 = vmatprep.subr.mxu0 0.0
      %882 = vmatpush1.msra.mxu0 0.0
      %883 = vmatprep.subr.mxu0 0.0
      %884 = vmatpush1.msra.mxu0 0.0
      %885 = vmatprep.subr.mxu0 0.0
      %886 = vmatpush1.msra.mxu0 0.0
      %887 = vmatprep.subr.mxu0 0.0
      %888 = vmatpush1.msra.mxu0 0.0
      %889 = vmatprep.subr.mxu0 0.0
      %890 = vmatpush1.msra.mxu0 0.0
      %891 = vmatprep.subr.mxu0 0.0
      %892 = vmatpush1.msra.mxu0 0.0
      %893 = vmatprep.subr.mxu0 0.0
      %894 = vmatpush1.msra.mxu0 0.0
      %895 = vmatprep.subr.mxu0 0.0
      %896 = vmatpush1.msra.mxu0 0.0
      %897 = vmatprep.subr.mxu0 0.0
      %898 = vmatpush1.msra.mxu0 0.0
      %899 = vmatprep.mubr.f32.mxu0 0.0
      %900 = vmatmul.mubr.f32.gmra.mrb[0].mxu0 %v824
      %v901 = vpop.f32.mrb[0].mxu0
      %v902 = vadd.f32 0.0, %v901
      %v903 = vpop.f32.mrb[0].mxu0
      %904 = vmatprep.mubr.f32.mxu0 0.0
      %905 = vmatmul.mubr.f32.gmra.mrb[0].mxu0 %v827
      %v906 = vpop.f32.mrb[0].mxu0
      %v907 = vadd.f32 0.0, %v906
      %v908 = vpop.f32.mrb[0].mxu0
      %909 = vmatprep.mubr.f32.mxu0 0.0
      %910 = vmatmul.mubr.f32.gmra.mrb[0].mxu0 %v830
      %v911 = vpop.f32.mrb[0].mxu0
      %v912 = vadd.f32 0.0, %v911
      %v913 = vpop.f32.mrb[0].mxu0
      %914 = vmatprep.mubr.f32.mxu0 0.0
      %915 = vmatmul.mubr.f32.gmra.mrb[0].mxu0 %v833
      %v916 = vpop.f32.mrb[0].mxu0
      %v917 = vadd.f32 0.0, %v916
      %v918 = vpop.f32.mrb[0].mxu0
      %919 = vdwg.mxu0
      %920 = vset.pattern.permute.xlu0 5
      %921 = vperm.xlu0 %920, %v685
      %v922 = vpop.permute.xlu0 %921
      %924 = vset.pattern.permute.xlu0 5
      %925 = vperm.xlu0 %924, %v690
      %v926 = vpop.permute.xlu0 %925
      %928 = vset.pattern.permute.xlu0 5
      %929 = vperm.xlu0 %928, %v695
      %v930 = vpop.permute.xlu0 %929
      %932 = vset.pattern.permute.xlu0 5
      %933 = vperm.xlu0 %932, %v700
      %v934 = vpop.permute.xlu0 %933
      %v936 = vlaneseq
      %v937 = vshrl.u32 %v936, 7
      %v938 = vsub.s32 1, %v937
      %v939 = vrot.slane %v488, %v938
      %v940 = vadd.f32 %v922, %v939
      %v941 = vadd.f32 %v926, %v939
      %v942 = vadd.f32 %v930, %v939
      %v943 = vadd.f32 %v934, %v939
      %vm944 = vcmp.ge.f32.partialorder %v940, 0.0
      %vm945 = vcmp.ge.f32.partialorder %v941, 0.0
      %vm946 = vcmp.ge.f32.partialorder %v942, 0.0
      %vm947 = vcmp.ge.f32.partialorder %v943, 0.0
      %v948 = vmul.f32 %v940, 0.01
      %v949 = vmul.f32 %v941, 0.01
      %v950 = vmul.f32 %v942, 0.01
      %v951 = vmul.f32 %v943, 0.01
      %v952 = vsel %vm944, %v940, %v948
      %v953 = vsel %vm945, %v941, %v949
      %v954 = vsel %vm946, %v942, %v950
      %v955 = vsel %vm947, %v943, %v951
      %v956 = vsel %vm770, %v952, -1e+30
      %v957 = vsel %vm771, %v953, -1e+30
      %v958 = vsel %vm772, %v954, -1e+30
      %v959 = vsel %vm773, %v955, -1e+30
      %v960 = vsel %vm778, %v956, -inf
      %961 = vmax.xlane.f32.xlu0 %v960
      %v962 = vpop.xlane.xlu0 %961
      %v963 = vsel %vm778, %v957, -inf
      %964 = vmax.xlane.f32.xlu0 %v963
      %v965 = vpop.xlane.xlu0 %964
      %v966 = vsel %vm778, %v958, -inf
      %967 = vmax.xlane.f32.xlu0 %v966
      %v968 = vpop.xlane.xlu0 %967
      %v969 = vsel %vm778, %v959, -inf
      %970 = vmax.xlane.f32.xlu0 %v969
      %v971 = vpop.xlane.xlu0 %970
      %v972 = vsub.f32 %v956, %v962
      %v973 = vsub.f32 %v957, %v965
      %v974 = vsub.f32 %v958, %v968
      %v975 = vsub.f32 %v959, %v971
      %v976 = vmul.f32 %v972, 1.442695
      %v977 = vpow.pop %v976
      %v978 = vmul.f32 %v973, 1.442695
      %v979 = vpow.pop %v978
      %v980 = vmul.f32 %v974, 1.442695
      %v981 = vpow.pop %v980
      %v982 = vmul.f32 %v975, 1.442695
      %v983 = vpow.pop %v982
      %v984 = vsel %vm778, %v977, 0.0
      %985 = vadd.xlane.f32.xlu0 %v984
      %v986 = vpop.xlane.xlu0 %985
      %v987 = vsel %vm778, %v979, 0.0
      %988 = vadd.xlane.f32.xlu0 %v987
      %v989 = vpop.xlane.xlu0 %988
      %v990 = vsel %vm778, %v981, 0.0
      %991 = vadd.xlane.f32.xlu0 %v990
      %v992 = vpop.xlane.xlu0 %991
      %v993 = vsel %vm778, %v983, 0.0
      %994 = vadd.xlane.f32.xlu0 %v993
      %v995 = vpop.xlane.xlu0 %994
      %v996 = vrcp.pop %v986
      %v997 = vmul.f32 %v977, %v996
      %v998 = vrcp.pop %v989
      %v999 = vmul.f32 %v979, %v998
      %v1000 = vrcp.pop %v992
      %v1001 = vmul.f32 %v981, %v1000
      %v1002 = vrcp.pop %v995
      %v1003 = vmul.f32 %v983, %v1002
      %1004 = vrot.lane.b32.xlu0 %v304, 120
      %v1005 = vpop.permute.xlu0 %1004
      %1006 = vrot.lane.b32.xlu0 %v309, 120
      %v1007 = vpop.permute.xlu0 %1006
      %1008 = vrot.lane.b32.xlu0 %v314, 120
      %v1009 = vpop.permute.xlu0 %1008
      %1010 = vrot.lane.b32.xlu0 %v319, 120
      %v1011 = vpop.permute.xlu0 %1010
      %1012 = vrot.lane.b32.xlu0 %v324, 120
      %v1013 = vpop.permute.xlu0 %1012
      %1014 = vrot.lane.b32.xlu0 %v329, 120
      %v1015 = vpop.permute.xlu0 %1014
      %1016 = vrot.lane.b32.xlu0 %v334, 120
      %v1017 = vpop.permute.xlu0 %1016
      %1018 = vrot.lane.b32.xlu0 %v339, 120
      %v1019 = vpop.permute.xlu0 %1018
      %v1029 = vsel %vm778, %v997, 0
      %v1032 = vsel %vm778, %v999, 0
      %v1035 = vsel %vm778, %v1001, 0
      %v1038 = vsel %vm778, %v1003, 0
      %1040 = vmatprep.subr.mxu0 0.0
      %1041 = vmatpush1.msra.mxu0 %v1005
      %1042 = vmatprep.subr.mxu0 0.0
      %1043 = vmatpush1.msra.mxu0 %v1007
      %1044 = vmatprep.subr.mxu0 0.0
      %1045 = vmatpush1.msra.mxu0 %v1009
      %1046 = vmatprep.subr.mxu0 0.0
      %1047 = vmatpush1.msra.mxu0 %v1011
      %1048 = vmatprep.subr.mxu0 0.0
      %1049 = vmatpush1.msra.mxu0 %v1013
      %1050 = vmatprep.subr.mxu0 0.0
      %1051 = vmatpush1.msra.mxu0 %v1015
      %1052 = vmatprep.subr.mxu0 0.0
      %1053 = vmatpush1.msra.mxu0 %v1017
      %1054 = vmatprep.subr.mxu0 0.0
      %1055 = vmatpush1.msra.mxu0 %v1019
      %1056 = vmatprep.subr.mxu0 0.0
      %1057 = vmatpush1.msra.mxu0 0.0
      %1058 = vmatprep.subr.mxu0 0.0
      %1059 = vmatpush1.msra.mxu0 0.0
      %1060 = vmatprep.subr.mxu0 0.0
      %1061 = vmatpush1.msra.mxu0 0.0
      %1062 = vmatprep.subr.mxu0 0.0
      %1063 = vmatpush1.msra.mxu0 0.0
      %1064 = vmatprep.subr.mxu0 0.0
      %1065 = vmatpush1.msra.mxu0 0.0
      %1066 = vmatprep.subr.mxu0 0.0
      %1067 = vmatpush1.msra.mxu0 0.0
      %1068 = vmatprep.subr.mxu0 0.0
      %1069 = vmatpush1.msra.mxu0 0.0
      %1070 = vmatprep.subr.mxu0 0.0
      %1071 = vmatpush1.msra.mxu0 0.0
      %1072 = vmatprep.subr.mxu0 0.0
      %1073 = vmatpush1.msra.mxu0 0.0
      %1074 = vmatprep.subr.mxu0 0.0
      %1075 = vmatpush1.msra.mxu0 0.0
      %1076 = vmatprep.subr.mxu0 0.0
      %1077 = vmatpush1.msra.mxu0 0.0
      %1078 = vmatprep.subr.mxu0 0.0
      %1079 = vmatpush1.msra.mxu0 0.0
      %1080 = vmatprep.subr.mxu0 0.0
      %1081 = vmatpush1.msra.mxu0 0.0
      %1082 = vmatprep.subr.mxu0 0.0
      %1083 = vmatpush1.msra.mxu0 0.0
      %1084 = vmatprep.subr.mxu0 0.0
      %1085 = vmatpush1.msra.mxu0 0.0
      %1086 = vmatprep.subr.mxu0 0.0
      %1087 = vmatpush1.msra.mxu0 0.0
      %1088 = vmatprep.subr.mxu0 0.0
      %1089 = vmatpush1.msra.mxu0 0.0
      %1090 = vmatprep.subr.mxu0 0.0
      %1091 = vmatpush1.msra.mxu0 0.0
      %1092 = vmatprep.subr.mxu0 0.0
      %1093 = vmatpush1.msra.mxu0 0.0
      %1094 = vmatprep.subr.mxu0 0.0
      %1095 = vmatpush1.msra.mxu0 0.0
      %1096 = vmatprep.subr.mxu0 0.0
      %1097 = vmatpush1.msra.mxu0 0.0
      %1098 = vmatprep.subr.mxu0 0.0
      %1099 = vmatpush1.msra.mxu0 0.0
      %1100 = vmatprep.subr.mxu0 0.0
      %1101 = vmatpush1.msra.mxu0 0.0
      %1102 = vmatprep.subr.mxu0 0.0
      %1103 = vmatpush1.msra.mxu0 0.0
      %1104 = vmatprep.mubr.f32.mxu0 0.0
      %1105 = vmatmul.mubr.f32.gmra.mrb[0].mxu0 %v1029
      %v1106 = vpop.f32.mrb[0].mxu0
      %v1107 = vadd.f32 0.0, %v1106
      %v1108 = vpop.f32.mrb[0].mxu0
      %1109 = vmatprep.mubr.f32.mxu0 0.0
      %1110 = vmatmul.mubr.f32.gmra.mrb[0].mxu0 %v1032
      %v1111 = vpop.f32.mrb[0].mxu0
      %v1112 = vadd.f32 0.0, %v1111
      %v1113 = vpop.f32.mrb[0].mxu0
      %1114 = vmatprep.mubr.f32.mxu0 0.0
      %1115 = vmatmul.mubr.f32.gmra.mrb[0].mxu0 %v1035
      %v1116 = vpop.f32.mrb[0].mxu0
      %v1117 = vadd.f32 0.0, %v1116
      %v1118 = vpop.f32.mrb[0].mxu0
      %1119 = vmatprep.mubr.f32.mxu0 0.0
      %1120 = vmatmul.mubr.f32.gmra.mrb[0].mxu0 %v1038
      %v1121 = vpop.f32.mrb[0].mxu0
      %v1122 = vadd.f32 0.0, %v1121
      %v1123 = vpop.f32.mrb[0].mxu0
      %1124 = vdwg.mxu0
      %1125 = vset.pattern.permute.xlu0 6
      %1126 = vperm.xlu0 %1125, %v685
      %v1127 = vpop.permute.xlu0 %1126
      %1129 = vset.pattern.permute.xlu0 6
      %1130 = vperm.xlu0 %1129, %v690
      %v1131 = vpop.permute.xlu0 %1130
      %1133 = vset.pattern.permute.xlu0 6
      %1134 = vperm.xlu0 %1133, %v695
      %v1135 = vpop.permute.xlu0 %1134
      %1137 = vset.pattern.permute.xlu0 6
      %1138 = vperm.xlu0 %1137, %v700
      %v1139 = vpop.permute.xlu0 %1138
      %v1141 = vlaneseq
      %v1142 = vshrl.u32 %v1141, 7
      %v1143 = vsub.s32 2, %v1142
      %v1144 = vrot.slane %v488, %v1143
      %v1145 = vadd.f32 %v1127, %v1144
      %v1146 = vadd.f32 %v1131, %v1144
      %v1147 = vadd.f32 %v1135, %v1144
      %v1148 = vadd.f32 %v1139, %v1144
      %vm1149 = vcmp.ge.f32.partialorder %v1145, 0.0
      %vm1150 = vcmp.ge.f32.partialorder %v1146, 0.0
      %vm1151 = vcmp.ge.f32.partialorder %v1147, 0.0
      %vm1152 = vcmp.ge.f32.partialorder %v1148, 0.0
      %v1153 = vmul.f32 %v1145, 0.01
      %v1154 = vmul.f32 %v1146, 0.01
      %v1155 = vmul.f32 %v1147, 0.01
      %v1156 = vmul.f32 %v1148, 0.01
      %v1157 = vsel %vm1149, %v1145, %v1153
      %v1158 = vsel %vm1150, %v1146, %v1154
      %v1159 = vsel %vm1151, %v1147, %v1155
      %v1160 = vsel %vm1152, %v1148, %v1156
      %v1161 = vsel %vm770, %v1157, -1e+30
      %v1162 = vsel %vm771, %v1158, -1e+30
      %v1163 = vsel %vm772, %v1159, -1e+30
      %v1164 = vsel %vm773, %v1160, -1e+30
      %v1165 = vsel %vm778, %v1161, -inf
      %1166 = vmax.xlane.f32.xlu0 %v1165
      %v1167 = vpop.xlane.xlu0 %1166
      %v1168 = vsel %vm778, %v1162, -inf
      %1169 = vmax.xlane.f32.xlu0 %v1168
      %v1170 = vpop.xlane.xlu0 %1169
      %v1171 = vsel %vm778, %v1163, -inf
      %1172 = vmax.xlane.f32.xlu0 %v1171
      %v1173 = vpop.xlane.xlu0 %1172
      %v1174 = vsel %vm778, %v1164, -inf
      %1175 = vmax.xlane.f32.xlu0 %v1174
      %v1176 = vpop.xlane.xlu0 %1175
      %v1177 = vsub.f32 %v1161, %v1167
      %v1178 = vsub.f32 %v1162, %v1170
      %v1179 = vsub.f32 %v1163, %v1173
      %v1180 = vsub.f32 %v1164, %v1176
      %v1181 = vmul.f32 %v1177, 1.442695
      %v1182 = vpow.pop %v1181
      %v1183 = vmul.f32 %v1178, 1.442695
      %v1184 = vpow.pop %v1183
      %v1185 = vmul.f32 %v1179, 1.442695
      %v1186 = vpow.pop %v1185
      %v1187 = vmul.f32 %v1180, 1.442695
      %v1188 = vpow.pop %v1187
      %v1189 = vsel %vm778, %v1182, 0.0
      %1190 = vadd.xlane.f32.xlu0 %v1189
      %v1191 = vpop.xlane.xlu0 %1190
      %v1192 = vsel %vm778, %v1184, 0.0
      %1193 = vadd.xlane.f32.xlu0 %v1192
      %v1194 = vpop.xlane.xlu0 %1193
      %v1195 = vsel %vm778, %v1186, 0.0
      %1196 = vadd.xlane.f32.xlu0 %v1195
      %v1197 = vpop.xlane.xlu0 %1196
      %v1198 = vsel %vm778, %v1188, 0.0
      %1199 = vadd.xlane.f32.xlu0 %v1198
      %v1200 = vpop.xlane.xlu0 %1199
      %v1201 = vrcp.pop %v1191
      %v1202 = vmul.f32 %v1182, %v1201
      %v1203 = vrcp.pop %v1194
      %v1204 = vmul.f32 %v1184, %v1203
      %v1205 = vrcp.pop %v1197
      %v1206 = vmul.f32 %v1186, %v1205
      %v1207 = vrcp.pop %v1200
      %v1208 = vmul.f32 %v1188, %v1207
      %1209 = vrot.lane.b32.xlu0 %v304, 112
      %v1210 = vpop.permute.xlu0 %1209
      %1211 = vrot.lane.b32.xlu0 %v309, 112
      %v1212 = vpop.permute.xlu0 %1211
      %1213 = vrot.lane.b32.xlu0 %v314, 112
      %v1214 = vpop.permute.xlu0 %1213
      %1215 = vrot.lane.b32.xlu0 %v319, 112
      %v1216 = vpop.permute.xlu0 %1215
      %1217 = vrot.lane.b32.xlu0 %v324, 112
      %v1218 = vpop.permute.xlu0 %1217
      %1219 = vrot.lane.b32.xlu0 %v329, 112
      %v1220 = vpop.permute.xlu0 %1219
      %1221 = vrot.lane.b32.xlu0 %v334, 112
      %v1222 = vpop.permute.xlu0 %1221
      %1223 = vrot.lane.b32.xlu0 %v339, 112
      %v1224 = vpop.permute.xlu0 %1223
      %v1234 = vsel %vm778, %v1202, 0
      %v1237 = vsel %vm778, %v1204, 0
      %v1240 = vsel %vm778, %v1206, 0
      %v1243 = vsel %vm778, %v1208, 0
      %1245 = vmatprep.subr.mxu0 0.0
      %1246 = vmatpush1.msra.mxu0 %v1210
      %1247 = vmatprep.subr.mxu0 0.0
      %1248 = vmatpush1.msra.mxu0 %v1212
      %1249 = vmatprep.subr.mxu0 0.0
      %1250 = vmatpush1.msra.mxu0 %v1214
      %1251 = vmatprep.subr.mxu0 0.0
      %1252 = vmatpush1.msra.mxu0 %v1216
      %1253 = vmatprep.subr.mxu0 0.0
      %1254 = vmatpush1.msra.mxu0 %v1218
      %1255 = vmatprep.subr.mxu0 0.0
      %1256 = vmatpush1.msra.mxu0 %v1220
      %1257 = vmatprep.subr.mxu0 0.0
      %1258 = vmatpush1.msra.mxu0 %v1222
      %1259 = vmatprep.subr.mxu0 0.0
      %1260 = vmatpush1.msra.mxu0 %v1224
      %1261 = vmatprep.subr.mxu0 0.0
      %1262 = vmatpush1.msra.mxu0 0.0
      %1263 = vmatprep.subr.mxu0 0.0
      %1264 = vmatpush1.msra.mxu0 0.0
      %1265 = vmatprep.subr.mxu0 0.0
      %1266 = vmatpush1.msra.mxu0 0.0
      %1267 = vmatprep.subr.mxu0 0.0
      %1268 = vmatpush1.msra.mxu0 0.0
      %1269 = vmatprep.subr.mxu0 0.0
      %1270 = vmatpush1.msra.mxu0 0.0
      %1271 = vmatprep.subr.mxu0 0.0
      %1272 = vmatpush1.msra.mxu0 0.0
      %1273 = vmatprep.subr.mxu0 0.0
      %1274 = vmatpush1.msra.mxu0 0.0
      %1275 = vmatprep.subr.mxu0 0.0
      %1276 = vmatpush1.msra.mxu0 0.0
      %1277 = vmatprep.subr.mxu0 0.0
      %1278 = vmatpush1.msra.mxu0 0.0
      %1279 = vmatprep.subr.mxu0 0.0
      %1280 = vmatpush1.msra.mxu0 0.0
      %1281 = vmatprep.subr.mxu0 0.0
      %1282 = vmatpush1.msra.mxu0 0.0
      %1283 = vmatprep.subr.mxu0 0.0
      %1284 = vmatpush1.msra.mxu0 0.0
      %1285 = vmatprep.subr.mxu0 0.0
      %1286 = vmatpush1.msra.mxu0 0.0
      %1287 = vmatprep.subr.mxu0 0.0
      %1288 = vmatpush1.msra.mxu0 0.0
      %1289 = vmatprep.subr.mxu0 0.0
      %1290 = vmatpush1.msra.mxu0 0.0
      %1291 = vmatprep.subr.mxu0 0.0
      %1292 = vmatpush1.msra.mxu0 0.0
      %1293 = vmatprep.subr.mxu0 0.0
      %1294 = vmatpush1.msra.mxu0 0.0
      %1295 = vmatprep.subr.mxu0 0.0
      %1296 = vmatpush1.msra.mxu0 0.0
      %1297 = vmatprep.subr.mxu0 0.0
      %1298 = vmatpush1.msra.mxu0 0.0
      %1299 = vmatprep.subr.mxu0 0.0
      %1300 = vmatpush1.msra.mxu0 0.0
      %1301 = vmatprep.subr.mxu0 0.0
      %1302 = vmatpush1.msra.mxu0 0.0
      %1303 = vmatprep.subr.mxu0 0.0
      %1304 = vmatpush1.msra.mxu0 0.0
      %1305 = vmatprep.subr.mxu0 0.0
      %1306 = vmatpush1.msra.mxu0 0.0
      %1307 = vmatprep.subr.mxu0 0.0
      %1308 = vmatpush1.msra.mxu0 0.0
      %1309 = vmatprep.mubr.f32.mxu0 0.0
      %1310 = vmatmul.mubr.f32.gmra.mrb[0].mxu0 %v1234
      %v1311 = vpop.f32.mrb[0].mxu0
      %v1312 = vadd.f32 0.0, %v1311
      %v1313 = vpop.f32.mrb[0].mxu0
      %1314 = vmatprep.mubr.f32.mxu0 0.0
      %1315 = vmatmul.mubr.f32.gmra.mrb[0].mxu0 %v1237
      %v1316 = vpop.f32.mrb[0].mxu0
      %v1317 = vadd.f32 0.0, %v1316
      %v1318 = vpop.f32.mrb[0].mxu0
      %1319 = vmatprep.mubr.f32.mxu0 0.0
      %1320 = vmatmul.mubr.f32.gmra.mrb[0].mxu0 %v1240
      %v1321 = vpop.f32.mrb[0].mxu0
      %v1322 = vadd.f32 0.0, %v1321
      %v1323 = vpop.f32.mrb[0].mxu0
      %1324 = vmatprep.mubr.f32.mxu0 0.0
      %1325 = vmatmul.mubr.f32.gmra.mrb[0].mxu0 %v1243
      %v1326 = vpop.f32.mrb[0].mxu0
      %v1327 = vadd.f32 0.0, %v1326
      %v1328 = vpop.f32.mrb[0].mxu0
      %1329 = vdwg.mxu0
      %1330 = vset.pattern.permute.xlu0 7
      %1331 = vperm.xlu0 %1330, %v685
      %v1332 = vpop.permute.xlu0 %1331
      %1334 = vset.pattern.permute.xlu0 7
      %1335 = vperm.xlu0 %1334, %v690
      %v1336 = vpop.permute.xlu0 %1335
      %1338 = vset.pattern.permute.xlu0 7
      %1339 = vperm.xlu0 %1338, %v695
      %v1340 = vpop.permute.xlu0 %1339
      %1342 = vset.pattern.permute.xlu0 7
      %1343 = vperm.xlu0 %1342, %v700
      %v1344 = vpop.permute.xlu0 %1343
      %v1346 = vlaneseq
      %v1347 = vshrl.u32 %v1346, 7
      %v1348 = vsub.s32 3, %v1347
      %v1349 = vrot.slane %v488, %v1348
      %v1350 = vadd.f32 %v1332, %v1349
      %v1351 = vadd.f32 %v1336, %v1349
      %v1352 = vadd.f32 %v1340, %v1349
      %v1353 = vadd.f32 %v1344, %v1349
      %vm1354 = vcmp.ge.f32.partialorder %v1350, 0.0
      %vm1355 = vcmp.ge.f32.partialorder %v1351, 0.0
      %vm1356 = vcmp.ge.f32.partialorder %v1352, 0.0
      %vm1357 = vcmp.ge.f32.partialorder %v1353, 0.0
      %v1358 = vmul.f32 %v1350, 0.01
      %v1359 = vmul.f32 %v1351, 0.01
      %v1360 = vmul.f32 %v1352, 0.01
      %v1361 = vmul.f32 %v1353, 0.01
      %v1362 = vsel %vm1354, %v1350, %v1358
      %v1363 = vsel %vm1355, %v1351, %v1359
      %v1364 = vsel %vm1356, %v1352, %v1360
      %v1365 = vsel %vm1357, %v1353, %v1361
      %v1366 = vsel %vm770, %v1362, -1e+30
      %v1367 = vsel %vm771, %v1363, -1e+30
      %v1368 = vsel %vm772, %v1364, -1e+30
      %v1369 = vsel %vm773, %v1365, -1e+30
      %v1370 = vsel %vm778, %v1366, -inf
      %1371 = vmax.xlane.f32.xlu0 %v1370
      %v1372 = vpop.xlane.xlu0 %1371
      %v1373 = vsel %vm778, %v1367, -inf
      %1374 = vmax.xlane.f32.xlu0 %v1373
      %v1375 = vpop.xlane.xlu0 %1374
      %v1376 = vsel %vm778, %v1368, -inf
      %1377 = vmax.xlane.f32.xlu0 %v1376
      %v1378 = vpop.xlane.xlu0 %1377
      %v1379 = vsel %vm778, %v1369, -inf
      %1380 = vmax.xlane.f32.xlu0 %v1379
      %v1381 = vpop.xlane.xlu0 %1380
      %v1382 = vsub.f32 %v1366, %v1372
      %v1383 = vsub.f32 %v1367, %v1375
      %v1384 = vsub.f32 %v1368, %v1378
      %v1385 = vsub.f32 %v1369, %v1381
      %v1386 = vmul.f32 %v1382, 1.442695
      %v1387 = vpow.pop %v1386
      %v1388 = vmul.f32 %v1383, 1.442695
      %v1389 = vpow.pop %v1388
      %v1390 = vmul.f32 %v1384, 1.442695
      %v1391 = vpow.pop %v1390
      %v1392 = vmul.f32 %v1385, 1.442695
      %v1393 = vpow.pop %v1392
      %v1394 = vsel %vm778, %v1387, 0.0
      %1395 = vadd.xlane.f32.xlu0 %v1394
      %v1396 = vpop.xlane.xlu0 %1395
      %v1397 = vsel %vm778, %v1389, 0.0
      %1398 = vadd.xlane.f32.xlu0 %v1397
      %v1399 = vpop.xlane.xlu0 %1398
      %v1400 = vsel %vm778, %v1391, 0.0
      %1401 = vadd.xlane.f32.xlu0 %v1400
      %v1402 = vpop.xlane.xlu0 %1401
      %v1403 = vsel %vm778, %v1393, 0.0
      %1404 = vadd.xlane.f32.xlu0 %v1403
      %v1405 = vpop.xlane.xlu0 %1404
      %v1406 = vrcp.pop %v1396
      %v1407 = vmul.f32 %v1387, %v1406
      %v1408 = vrcp.pop %v1399
      %v1409 = vmul.f32 %v1389, %v1408
      %v1410 = vrcp.pop %v1402
      %v1411 = vmul.f32 %v1391, %v1410
      %v1412 = vrcp.pop %v1405
      %v1413 = vmul.f32 %v1393, %v1412
      %1414 = vrot.lane.b32.xlu0 %v304, 104
      %v1415 = vpop.permute.xlu0 %1414
      %1416 = vrot.lane.b32.xlu0 %v309, 104
      %v1417 = vpop.permute.xlu0 %1416
      %1418 = vrot.lane.b32.xlu0 %v314, 104
      %v1419 = vpop.permute.xlu0 %1418
      %1420 = vrot.lane.b32.xlu0 %v319, 104
      %v1421 = vpop.permute.xlu0 %1420
      %1422 = vrot.lane.b32.xlu0 %v324, 104
      %v1423 = vpop.permute.xlu0 %1422
      %1424 = vrot.lane.b32.xlu0 %v329, 104
      %v1425 = vpop.permute.xlu0 %1424
      %1426 = vrot.lane.b32.xlu0 %v334, 104
      %v1427 = vpop.permute.xlu0 %1426
      %1428 = vrot.lane.b32.xlu0 %v339, 104
      %v1429 = vpop.permute.xlu0 %1428
      %v1439 = vsel %vm778, %v1407, 0
      %v1442 = vsel %vm778, %v1409, 0
      %v1445 = vsel %vm778, %v1411, 0
      %v1448 = vsel %vm778, %v1413, 0
      %1450 = vmatprep.subr.mxu0 0.0
      %1451 = vmatpush1.msra.mxu0 %v1415
      %1452 = vmatprep.subr.mxu0 0.0
      %1453 = vmatpush1.msra.mxu0 %v1417
      %1454 = vmatprep.subr.mxu0 0.0
      %1455 = vmatpush1.msra.mxu0 %v1419
      %1456 = vmatprep.subr.mxu0 0.0
      %1457 = vmatpush1.msra.mxu0 %v1421
      %1458 = vmatprep.subr.mxu0 0.0
      %1459 = vmatpush1.msra.mxu0 %v1423
      %1460 = vmatprep.subr.mxu0 0.0
      %1461 = vmatpush1.msra.mxu0 %v1425
      %1462 = vmatprep.subr.mxu0 0.0
      %1463 = vmatpush1.msra.mxu0 %v1427
      %1464 = vmatprep.subr.mxu0 0.0
      %1465 = vmatpush1.msra.mxu0 %v1429
      %1466 = vmatprep.subr.mxu0 0.0
      %1467 = vmatpush1.msra.mxu0 0.0
      %1468 = vmatprep.subr.mxu0 0.0
      %1469 = vmatpush1.msra.mxu0 0.0
      %1470 = vmatprep.subr.mxu0 0.0
      %1471 = vmatpush1.msra.mxu0 0.0
      %1472 = vmatprep.subr.mxu0 0.0
      %1473 = vmatpush1.msra.mxu0 0.0
      %1474 = vmatprep.subr.mxu0 0.0
      %1475 = vmatpush1.msra.mxu0 0.0
      %1476 = vmatprep.subr.mxu0 0.0
      %1477 = vmatpush1.msra.mxu0 0.0
      %1478 = vmatprep.subr.mxu0 0.0
      %1479 = vmatpush1.msra.mxu0 0.0
      %1480 = vmatprep.subr.mxu0 0.0
      %1481 = vmatpush1.msra.mxu0 0.0
      %1482 = vmatprep.subr.mxu0 0.0
      %1483 = vmatpush1.msra.mxu0 0.0
      %1484 = vmatprep.subr.mxu0 0.0
      %1485 = vmatpush1.msra.mxu0 0.0
      %1486 = vmatprep.subr.mxu0 0.0
      %1487 = vmatpush1.msra.mxu0 0.0
      %1488 = vmatprep.subr.mxu0 0.0
      %1489 = vmatpush1.msra.mxu0 0.0
      %1490 = vmatprep.subr.mxu0 0.0
      %1491 = vmatpush1.msra.mxu0 0.0
      %1492 = vmatprep.subr.mxu0 0.0
      %1493 = vmatpush1.msra.mxu0 0.0
      %1494 = vmatprep.subr.mxu0 0.0
      %1495 = vmatpush1.msra.mxu0 0.0
      %1496 = vmatprep.subr.mxu0 0.0
      %1497 = vmatpush1.msra.mxu0 0.0
      %1498 = vmatprep.subr.mxu0 0.0
      %1499 = vmatpush1.msra.mxu0 0.0
      %1500 = vmatprep.subr.mxu0 0.0
      %1501 = vmatpush1.msra.mxu0 0.0
      %1502 = vmatprep.subr.mxu0 0.0
      %1503 = vmatpush1.msra.mxu0 0.0
      %1504 = vmatprep.subr.mxu0 0.0
      %1505 = vmatpush1.msra.mxu0 0.0
      %1506 = vmatprep.subr.mxu0 0.0
      %1507 = vmatpush1.msra.mxu0 0.0
      %1508 = vmatprep.subr.mxu0 0.0
      %1509 = vmatpush1.msra.mxu0 0.0
      %1510 = vmatprep.subr.mxu0 0.0
      %1511 = vmatpush1.msra.mxu0 0.0
      %1512 = vmatprep.subr.mxu0 0.0
      %1513 = vmatpush1.msra.mxu0 0.0
      %1514 = vmatprep.mubr.f32.mxu0 0.0
      %1515 = vmatmul.mubr.f32.gmra.mrb[0].mxu0 %v1439
      %v1516 = vpop.f32.mrb[0].mxu0
      %v1517 = vadd.f32 0.0, %v1516
      %v1518 = vpop.f32.mrb[0].mxu0
      %1519 = vmatprep.mubr.f32.mxu0 0.0
      %1520 = vmatmul.mubr.f32.gmra.mrb[0].mxu0 %v1442
      %v1521 = vpop.f32.mrb[0].mxu0
      %v1522 = vadd.f32 0.0, %v1521
      %v1523 = vpop.f32.mrb[0].mxu0
      %1524 = vmatprep.mubr.f32.mxu0 0.0
      %1525 = vmatmul.mubr.f32.gmra.mrb[0].mxu0 %v1445
      %v1526 = vpop.f32.mrb[0].mxu0
      %v1527 = vadd.f32 0.0, %v1526
      %v1528 = vpop.f32.mrb[0].mxu0
      %1529 = vmatprep.mubr.f32.mxu0 0.0
      %1530 = vmatmul.mubr.f32.gmra.mrb[0].mxu0 %v1448
      %v1531 = vpop.f32.mrb[0].mxu0
      %v1532 = vadd.f32 0.0, %v1531
      %v1533 = vpop.f32.mrb[0].mxu0
      %1534 = vdwg.mxu0
      %1539 = vrot.lane.b32.xlu0 %v1107, 8
      %v1540 = vpop.permute.xlu0 %1539
      %1541 = vrot.lane.b32.xlu0 %v1112, 8
      %v1542 = vpop.permute.xlu0 %1541
      %1543 = vrot.lane.b32.xlu0 %v1117, 8
      %v1544 = vpop.permute.xlu0 %1543
      %1545 = vrot.lane.b32.xlu0 %v1122, 8
      %v1546 = vpop.permute.xlu0 %1545
      %1555 = vrot.lane.b32.xlu0 %v1312, 16
      %v1556 = vpop.permute.xlu0 %1555
      %1557 = vrot.lane.b32.xlu0 %v1317, 16
      %v1558 = vpop.permute.xlu0 %1557
      %1559 = vrot.lane.b32.xlu0 %v1322, 16
      %v1560 = vpop.permute.xlu0 %1559
      %1561 = vrot.lane.b32.xlu0 %v1327, 16
      %v1562 = vpop.permute.xlu0 %1561
      %1571 = vrot.lane.b32.xlu0 %v1517, 24
      %v1572 = vpop.permute.xlu0 %1571
      %1573 = vrot.lane.b32.xlu0 %v1522, 24
      %v1574 = vpop.permute.xlu0 %1573
      %1575 = vrot.lane.b32.xlu0 %v1527, 24
      %v1576 = vpop.permute.xlu0 %1575
      %1577 = vrot.lane.b32.xlu0 %v1532, 24
      %v1578 = vpop.permute.xlu0 %1577
      %v1583 = vsel %vm212, %v902, %v1540
      %v1584 = vsel %vm212, %v907, %v1542
      %v1585 = vsel %vm212, %v912, %v1544
      %v1586 = vsel %vm212, %v917, %v1546
      %vm1587 = vcmask 130048
      %v1588 = vsel %vm1587, %v1583, %v1556
      %v1589 = vsel %vm1587, %v1584, %v1558
      %v1590 = vsel %vm1587, %v1585, %v1560
      %v1591 = vsel %vm1587, %v1586, %v1562
      %vm1592 = vcmask 195584
      %v1593 = vsel %vm1592, %v1588, %v1572
      %v1594 = vsel %vm1592, %v1589, %v1574
      %v1595 = vsel %vm1592, %v1590, %v1576
      %v1596 = vsel %vm1592, %v1591, %v1578
      %1597 = vst.msk [vmem:[%s194] sm:$0xff] %vm342, %v1593
      %1598 = vst.msk [vmem:[%s194 + $0x8] sm:$0xff] %vm342, %v1594
      %1599 = vst.msk [vmem:[%s194 + $0x10] sm:$0xff] %vm342, %v1595
      %1600 = vst.msk [vmem:[%s194 + $0x18] sm:$0xff] %vm342, %v1596
      %s1601 = smul.u32 4, %s15
      %p1602 = scmp.lt.s32.totalorder %s1601, 7
      %s1603 = scalar_select %p1602, %s1601, 7
      %s1604 = smul.addr %s1603, 8
      %s1605 = scalar_lea.vmem %s4, %s1604
      // Predicated region
      $region37: #{tpu_custom_call.1} parent=35 // pred_check
        %p1606 = pneg %p122
      $region38: #{tpu_custom_call.1} parent=35 // pred_check_branch
        %1608 = sbr.rel (%p1606) target = $region40
      $region39: #{tpu_custom_call.1} parent=35 // pred_region
        %s1609 = smul.u32 4, %s15
      $region40: #{tpu_custom_call.1} parent=35 // pred_fallthru
        _
    $region36: #{tpu_custom_call.1} parent=5 // pred_fallthru
      _
    %p1610 = scmp.le.s32.totalorder 2, %s10
    // Predicated region
    $region41: #{tpu_custom_call.1} parent=5 // pred_check
      %p1611 = pneg %p1610
    $region42: #{tpu_custom_call.1} parent=5 // pred_check_branch
      %1613 = sbr.rel (%p1611) target = $region44
    $region43: #{tpu_custom_call.1} parent=5 // pred_region
      %s1614 = ssub.s32 %s10, 2
      // Predicated region
      $region45: #{tpu_custom_call.1} parent=43 // pred_check
        %p1615 = pneg %p128
      $region46: #{tpu_custom_call.1} parent=43 // pred_check_branch
        %1617 = sbr.rel (%p1615) target = $region48
      $region47: #{tpu_custom_call.1} parent=43 // pred_region
        %s1618 = smul.u32 4, %s16
        %p1619 = scmp.lt.s32.totalorder %s1618, 7
        %s1620 = scalar_select %p1619, %s1618, 7
        %s1621 = smul.addr %s1620, 8
        %s1622 = scalar_lea.vmem %s4, %s1621
      $region48: #{tpu_custom_call.1} parent=43 // pred_fallthru
        _
    $region44: #{tpu_custom_call.1} parent=5 // pred_fallthru
      _
  $region6: #{tpu_custom_call.1} parent=0 // loop_footer
    %s14 = sadd.s32 1, %s10
  $region7: #{tpu_custom_call.1} parent=0 // loop_footer_branch
    %9 = sbr.rel target = $region3
  $region8: #{tpu_custom_call.1} parent=0 // loop_exit
    _

</llo_original>
